<compile_context>
chip_gen: v5e
topology: v5e:2x2
jax: 0.10.0
libtpu: 0.0.40
codegen_flags: <defaults>
</compile_context>

<pallas_src>
import functools
from collections import OrderedDict

import jax
import jax.numpy as jnp
from jax.experimental import pallas as pl
from jax.experimental.pallas import tpu as pltpu


def _round_up(x, m):
    return ((x + m - 1) // m) * m


_PID_PAD = jnp.iinfo(jnp.int32).min  # never collides with real (non-negative) pids


def _batch_hard_kernel(emb_ref, pid_ref, out_ref, *, valid_b):
    """One grid step = one loss term: batch-hard soft-margin triplet loss.

    emb_ref : (1, Bp, Dp) float   -- zero-padded past (valid_b, D)
    pid_ref : (1, Bp, 1)  float32 -- integer-valued pids (sentinel on pad rows)
    out_ref : (1, 8, 128) float32 -- scalar loss splat over a lane-dense tile
    """
    e = emb_ref[0]                              # single VMEM read of the big tile
    e_f32 = e.astype(jnp.float32)
    e_bf16 = e.astype(jnp.bfloat16)

    # Gram matrix on the MXU: contraction over the LAST dim of BOTH operands
    # (trans-B dot) -> no (Bp, Dp) transpose materialized before the MXU.
    gram = jax.lax.dot_general(
        e_bf16, e_bf16,
        dimension_numbers=(((1,), (1,)), ((), ())),
        preferred_element_type=jnp.float32)     # (Bp, Bp) f32

    # Squared norms (f32); zero-padded rows/cols contribute nothing.
    sq = jnp.sum(e_f32 * e_f32, axis=-1, keepdims=True)      # (Bp, 1)
    d2 = sq + sq.T - 2.0 * gram                               # (Bp, Bp) squared dists

    # pid equality: single column operand, row form built in-kernel (tiny XLU op).
    pid_col = pid_ref[0]                                      # (Bp, 1) f32
    same = pid_col == pid_col.T                               # (Bp, Bp) bool

    bp = d2.shape[0]
    col_valid = jax.lax.broadcasted_iota(jnp.int32, (bp, bp), 1) < valid_b
    row_valid = jax.lax.broadcasted_iota(jnp.int32, (bp, 1), 0) < valid_b

    NEG = jnp.float32(-1e30)
    POS = jnp.float32(1e30)
    # Batch-hard mining on squared distances (sqrt is monotone -> equivalent),
    # restricted to valid (non-padded) columns.
    d2_pos = jnp.max(jnp.where(same & col_valid, d2, NEG), axis=-1, keepdims=True)
    d2_neg = jnp.min(jnp.where((~same) & col_valid, d2, POS), axis=-1, keepdims=True)
    d_pos = jnp.sqrt(jnp.maximum(d2_pos, 1e-12))              # (Bp, 1)
    d_neg = jnp.sqrt(jnp.maximum(d2_neg, 1e-12))              # (Bp, 1)

    # Soft-margin triplet loss, mean over the valid anchors only.
    per_anchor = jax.nn.softplus(d_pos - d_neg)               # (Bp, 1) f32
    total = jnp.sum(jnp.where(row_valid, per_anchor, 0.0))
    loss = total / jnp.float32(valid_b)
    out_ref[...] = jnp.full(out_ref.shape, loss, dtype=jnp.float32)


def _fused_batch_hard_triplet_losses(pairs):
    """pairs: list of (emb (B, D) float, pids (B,) int) with identical shapes.

    Runs ONE pallas_call with grid=(len(pairs),) and returns the (L,) float32
    vector of per-term batch-hard soft-margin triplet losses.
    """
    L = len(pairs)
    emb = jnp.stack([e for e, _ in pairs])                      # (L, B, D)
    pids = jnp.stack([p.astype(jnp.int32) for _, p in pairs])   # (L, B)
    _, B, D = emb.shape

    # Lane-dense padding: both B and D to multiples of 128.
    Bp = _round_up(B, 128)
    Dp = _round_up(D, 128)
    if (Bp, Dp) != (B, D):
        emb = jnp.pad(emb, ((0, 0), (0, Bp - B), (0, Dp - D)))
    if Bp != B:
        pids = jnp.pad(pids, ((0, 0), (0, Bp - B)), constant_values=_PID_PAD)

    # Single pid operand (column form), cast to f32 so the in-kernel
    # (Bp,1)->(1,Bp) transpose follows the proven f32 relayout path.  Exact for
    # |pid| < 2^24 (re-id person IDs are small non-negative ints).
    pid_col = pids.astype(jnp.float32).reshape(L, Bp, 1)

    kernel = functools.partial(_batch_hard_kernel, valid_b=B)
    out = pl.pallas_call(
        kernel,
        out_shape=jax.ShapeDtypeStruct((L, 8, 128), jnp.float32),
        grid=(L,),
        in_specs=[
            pl.BlockSpec((1, Bp, Dp), lambda l: (l, 0, 0)),
            pl.BlockSpec((1, Bp, 1), lambda l: (l, 0, 0)),
        ],
        out_specs=pl.BlockSpec((1, 8, 128), lambda l: (l, 0, 0)),
        compiler_params=pltpu.CompilerParams(
            dimension_semantics=("parallel",),   # v7x: split loss terms across both TCs
            vmem_limit_bytes=32 * 1024 * 1024),
    )(emb, pid_col)
    return out[:, 0, 0]                                          # (L,) float32


def batch_hard_triplet_loss(endpoints, data):
    """Single-term API (WeightModule fuses multiple same-shape terms into one call)."""
    return _fused_batch_hard_triplet_losses([(endpoints["emb"], data["pids"])])[0]


class WeightModule:
    """JAX mirror of triplet_reid WeightModule: sum the per-loss values.

    Loss terms that are `batch_hard_triplet_loss` and share input shapes are
    grouped and evaluated with a single fused Pallas call (grid over terms);
    any other loss callables are invoked individually.
    """

    def __init__(self, losses):
        self.losses = dict(losses)
        # TODO(synk): tensorboard logger.add_scalar has no JAX/Pallas equivalent; skipped.

    def __call__(self, split_endpoints, split_data, filtered):
        overall_loss = jnp.float32(0.0)
        buckets = OrderedDict()  # shape key -> list of (emb, pids)
        for loss_name, loss in self.losses.items():
            if filtered:
                endpoints = split_endpoints.get(loss_name)
                data = split_data.get(loss_name)
            else:
                endpoints = split_endpoints
                data = split_data
            if data is None or endpoints is None:
                continue
            if loss is batch_hard_triplet_loss:
                emb = endpoints["emb"]
                pids = data["pids"]
                key = (tuple(emb.shape), str(emb.dtype), tuple(pids.shape))
                buckets.setdefault(key, []).append((emb, pids))
            else:
                overall_loss = overall_loss + loss(endpoints, data)
        for pairs in buckets.values():
            overall_loss = overall_loss + jnp.sum(_fused_batch_hard_triplet_losses(pairs))
        return overall_loss


def _ref_loss(emb, pids):
    """Pure-JAX reference mirroring the kernel's bf16-gram / f32-mining math."""
    emb_bf16 = emb.astype(jnp.bfloat16)
    gram = jax.lax.dot_general(
        emb_bf16, emb_bf16,
        dimension_numbers=(((1,), (1,)), ((), ())),
        preferred_element_type=jnp.float32)
    sq = jnp.sum(emb.astype(jnp.float32) ** 2, axis=-1, keepdims=True)
    d2 = sq + sq.T - 2.0 * gram
    d = jnp.sqrt(jnp.maximum(d2, 1e-12))
    same = pids[:, None] == pids[None, :]
    d_pos = jnp.max(jnp.where(same, d, -1e30), axis=-1)
    d_neg = jnp.min(jnp.where(same, 1e30, d), axis=-1)
    return jnp.mean(jax.nn.softplus(d_pos - d_neg))


def _ref_loss_f32(emb, pids):
    """Full-f32 reference (looser tolerance vs the bf16-gram kernel)."""
    emb = emb.astype(jnp.float32)
    sq = jnp.sum(emb * emb, axis=-1, keepdims=True)
    d2 = sq + sq.T - 2.0 * (emb @ emb.T)
    d = jnp.sqrt(jnp.maximum(d2, 1e-12))
    same = pids[:, None] == pids[None, :]
    d_pos = jnp.max(jnp.where(same, d, -1e30), axis=-1)
    d_neg = jnp.min(jnp.where(same, 1e30, d), axis=-1)
    return jnp.mean(jax.nn.softplus(d_pos - d_neg))


if __name__ == "__main__":
    key = jax.random.PRNGKey(0)
    B, D = 8, 32  # 4 identities x 2 samples, 32-dim embeddings

    k_a, k_b = jax.random.split(key)
    emb_a = jax.random.normal(k_a, (B, D), dtype=jnp.float32)
    emb_b = jax.random.normal(k_b, (B, D), dtype=jnp.float32)
    pids_a = jnp.array([0, 0, 1, 1, 2, 2, 3, 3], dtype=jnp.int32)
    pids_b = jnp.array([5, 5, 5, 6, 6, 7, 7, 7], dtype=jnp.int32)

    # filtered=True: per-loss endpoints/data; the two terms are fused into one
    # pallas_call with grid=(2,).
    losses = {"trip_a": batch_hard_triplet_loss, "trip_b": batch_hard_triplet_loss}
    module = WeightModule(losses)
    split_endpoints = {"trip_a": {"emb": emb_a}, "trip_b": {"emb": emb_b}}
    split_data = {"trip_a": {"pids": pids_a}, "trip_b": {"pids": pids_b}}

    overall = module(split_endpoints, split_data, filtered=True)
    jax.block_until_ready(overall)

    ref = _ref_loss(emb_a, pids_a) + _ref_loss(emb_b, pids_b)
    ref_f32 = _ref_loss_f32(emb_a, pids_a) + _ref_loss_f32(emb_b, pids_b)
    assert jnp.allclose(overall, ref, atol=1e-4, rtol=1e-4), (overall, ref)
    assert jnp.allclose(overall, ref_f32, atol=5e-2, rtol=5e-2), (overall, ref_f32)

    # filtered=False: shared endpoints/data for a single loss term (grid=(1,)).
    single = WeightModule({"trip": batch_hard_triplet_loss})
    overall2 = single({"emb": emb_a}, {"pids": pids_a}, filtered=False)
    jax.block_until_ready(overall2)
    assert jnp.allclose(overall2, _ref_loss(emb_a, pids_a), atol=1e-4, rtol=1e-4)

    print("KERNEL_OK")
</pallas_src>

<mosaic_0001>
module attributes {stable_mosaic.version = 11 : i64} {
  func.func @_batch_hard_kernel(%arg0: i32, %arg1: memref<1x128x128xf32, #tpu.memory_space<vmem>>, %arg2: memref<1x128x1xf32, #tpu.memory_space<vmem>>, %arg3: memref<1x8x128xf32, #tpu.memory_space<vmem>>) attributes {dimension_semantics = [#tpu.dimension_semantics<parallel>], iteration_bounds = array<i64: 2>, scalar_prefetch = 0 : i64, scratch_operands = 0 : i64, tpu.core_type = #tpu.core_type<tc>, window_params = [{transform_indices = @transform_0, window_bounds = array<i64: 1, 128, 128>}, {transform_indices = @transform_1, window_bounds = array<i64: 1, 128, 1>}, {transform_indices = @transform_2, window_bounds = array<i64: 1, 8, 128>}]} {
    %c0 = arith.constant 0 : index
    %c0_0 = arith.constant 0 : index
    %c0_1 = arith.constant 0 : index
    %0 = vector.load %arg1[%c0, %c0_0, %c0_1] : memref<1x128x128xf32, #tpu.memory_space<vmem>>, vector<1x128x128xf32>
    %1 = vector.shape_cast %0 : vector<1x128x128xf32> to vector<128x128xf32>
    %2 = arith.truncf %1 : vector<128x128xf32> to vector<128x128xbf16>
    %cst = arith.constant dense<0.000000e+00> : vector<128x128xf32>
    %3 = tpu.matmul %2, %2, %cst {dimension_numbers = #tpu.dot_dimension_numbers<[1], [1], [0], [0], [0, 0, 1, 0], [], []>} : vector<128x128xbf16>, vector<128x128xbf16>, vector<128x128xf32> -> vector<128x128xf32>
    %4 = arith.mulf %1, %1 : vector<128x128xf32>
    %cst_2 = arith.constant dense<0.000000e+00> : vector<128xf32>
    %5 = vector.multi_reduction <add>, %4, %cst_2 [1] : vector<128x128xf32> to vector<128xf32>
    %6 = vector.shape_cast %5 : vector<128xf32> to vector<128x1xf32>
    %7 = tpu.transpose %6, [1, 0] : vector<128x1xf32> -> vector<1x128xf32>
    %8 = vector.broadcast %6 : vector<128x1xf32> to vector<128x128xf32>
    %9 = vector.broadcast %7 : vector<1x128xf32> to vector<128x128xf32>
    %10 = arith.addf %8, %9 : vector<128x128xf32>
    %cst_3 = arith.constant 2.000000e+00 : f32
    %11 = vector.broadcast %cst_3 : f32 to vector<128x128xf32>
    %12 = arith.mulf %11, %3 : vector<128x128xf32>
    %13 = arith.subf %10, %12 : vector<128x128xf32>
    %c0_4 = arith.constant 0 : index
    %c0_5 = arith.constant 0 : index
    %c0_6 = arith.constant 0 : index
    %14 = vector.load %arg2[%c0_4, %c0_5, %c0_6] : memref<1x128x1xf32, #tpu.memory_space<vmem>>, vector<1x128x1xf32>
    %15 = vector.shape_cast %14 : vector<1x128x1xf32> to vector<128x1xf32>
    %16 = tpu.transpose %15, [1, 0] : vector<128x1xf32> -> vector<1x128xf32>
    %17 = vector.broadcast %15 : vector<128x1xf32> to vector<128x128xf32>
    %18 = vector.broadcast %16 : vector<1x128xf32> to vector<128x128xf32>
    %19 = arith.cmpf oeq, %17, %18 : vector<128x128xf32>
    %20 = tpu.iota {dimensions = array<i32: 1>} : vector<128x128xi32>
    %c8_i32 = arith.constant 8 : i32
    %21 = vector.broadcast %c8_i32 : i32 to vector<128x128xi32>
    %22 = arith.cmpi slt, %20, %21 : vector<128x128xi32>
    %23 = tpu.iota {dimensions = array<i32: 0>} : vector<128x1xi32>
    %c8_i32_7 = arith.constant 8 : i32
    %24 = vector.broadcast %c8_i32_7 : i32 to vector<128x1xi32>
    %25 = arith.cmpi slt, %23, %24 : vector<128x1xi32>
    %26 = arith.andi %19, %22 : vector<128x128xi1>
    %cst_8 = arith.constant -1.000000e+30 : f32
    %27 = vector.broadcast %cst_8 : f32 to vector<128x128xf32>
    %28 = arith.select %26, %13, %27 : vector<128x128xi1>, vector<128x128xf32>
    %cst_9 = arith.constant dense<0xFF800000> : vector<128xf32>
    %29 = vector.multi_reduction <maximumf>, %28, %cst_9 [1] : vector<128x128xf32> to vector<128xf32>
    %30 = vector.shape_cast %29 : vector<128xf32> to vector<128x1xf32>
    %cst_10 = arith.constant dense<true> : vector<128x128xi1>
    %31 = arith.xori %19, %cst_10 : vector<128x128xi1>
    %32 = arith.andi %31, %22 : vector<128x128xi1>
    %cst_11 = arith.constant 1.000000e+30 : f32
    %33 = vector.broadcast %cst_11 : f32 to vector<128x128xf32>
    %34 = arith.select %32, %13, %33 : vector<128x128xi1>, vector<128x128xf32>
    %cst_12 = arith.constant dense<0x7F800000> : vector<128xf32>
    %35 = vector.multi_reduction <minimumf>, %34, %cst_12 [1] : vector<128x128xf32> to vector<128xf32>
    %36 = vector.shape_cast %35 : vector<128xf32> to vector<128x1xf32>
    %cst_13 = arith.constant 9.99999996E-13 : f32
    %37 = vector.broadcast %cst_13 : f32 to vector<128x1xf32>
    %38 = arith.maximumf %30, %37 : vector<128x1xf32>
    %39 = math.sqrt %38 : vector<128x1xf32>
    %cst_14 = arith.constant 9.99999996E-13 : f32
    %40 = vector.broadcast %cst_14 : f32 to vector<128x1xf32>
    %41 = arith.maximumf %36, %40 : vector<128x1xf32>
    %42 = math.sqrt %41 : vector<128x1xf32>
    %43 = arith.subf %39, %42 : vector<128x1xf32>
    %cst_15 = arith.constant 0.000000e+00 : f32
    %44 = vector.broadcast %cst_15 : f32 to vector<128x1xf32>
    %45 = arith.maximumf %43, %44 : vector<128x1xf32>
    %46 = vector.broadcast %cst_15 : f32 to vector<128x1xf32>
    %47 = arith.subf %43, %46 : vector<128x1xf32>
    %48 = arith.cmpf one, %47, %47 : vector<128x1xf32>
    %49 = vector.broadcast %cst_15 : f32 to vector<128x1xf32>
    %50 = arith.addf %43, %49 : vector<128x1xf32>
    %51 = math.absf %47 : vector<128x1xf32>
    %cst_16 = arith.constant 0.000000e+00 : f32
    %52 = vector.broadcast %cst_16 : f32 to vector<128x1xf32>
    %53 = arith.subf %52, %51 : vector<128x1xf32>
    %54 = math.exp %53 : vector<128x1xf32>
    %55 = math.log1p %54 : vector<128x1xf32>
    %56 = arith.addf %45, %55 : vector<128x1xf32>
    %57 = arith.select %48, %50, %56 : vector<128x1xi1>, vector<128x1xf32>
    %cst_17 = arith.constant 0.000000e+00 : f32
    %58 = vector.broadcast %cst_17 : f32 to vector<128x1xf32>
    %59 = arith.select %25, %57, %58 : vector<128x1xi1>, vector<128x1xf32>
    %60 = vector.shape_cast %59 : vector<128x1xf32> to vector<1x128x1xf32>
    %cst_18 = arith.constant dense<0.000000e+00> : vector<1xf32>
    %61 = vector.multi_reduction <add>, %60, %cst_18 [1, 2] : vector<1x128x1xf32> to vector<1xf32>
    %62 = vector.shape_cast %61 : vector<1xf32> to vector<1x1x1xf32>
    %63 = vector.extract %62[0, 0, 0] : f32 from vector<1x1x1xf32>
    %cst_19 = arith.constant 8.000000e+00 : f32
    %64 = arith.divf %63, %cst_19 : f32
    %65 = vector.broadcast %64 : f32 to vector<1x8x128xf32>
    %c0_20 = arith.constant 0 : index
    %c0_21 = arith.constant 0 : index
    %c0_22 = arith.constant 0 : index
    %66 = vector.load %arg3[%c0_20, %c0_21, %c0_22] : memref<1x8x128xf32, #tpu.memory_space<vmem>>, vector<1x8x128xf32>
    tpu.vector_store %arg3[%c0_20, %c0_21, %c0_22], %65 {strides = array<i32>} : memref<1x8x128xf32, #tpu.memory_space<vmem>>, vector<1x8x128xf32>,
    return
  }
  func.func @transform_0(%arg0: i32) -> (i32, i32, i32) {
    %c0_i32 = arith.constant 0 : i32
    %c0_i32_0 = arith.constant 0 : i32
    %c0_i32_1 = arith.constant 0 : i32
    return %arg0, %c0_i32, %c0_i32_0 : i32, i32, i32
  }
  func.func @transform_1(%arg0: i32) -> (i32, i32, i32) {
    %c0_i32 = arith.constant 0 : i32
    %c0_i32_0 = arith.constant 0 : i32
    %c0_i32_1 = arith.constant 0 : i32
    return %arg0, %c0_i32, %c0_i32_0 : i32, i32, i32
  }
  func.func @transform_2(%arg0: i32) -> (i32, i32, i32) {
    %c0_i32 = arith.constant 0 : i32
    %c0_i32_0 = arith.constant 0 : i32
    %c0_i32_1 = arith.constant 0 : i32
    return %arg0, %c0_i32, %c0_i32_0 : i32, i32, i32
  }
}

</mosaic_0001>

<llo_original>
// kernel: tpu_custom_call.1
$region0: #{tpu_custom_call.1}
  #allocation0 [shape = 'u32[]', space=smem, size = 0x4, offset = 0x4, fixed_abs, tag = 'smem constant byte address 0x4 - core index']
  #allocation1 [shape = 'u32[72,128]{1,0:T(1,128)}', space=vmem, size = 0x9000, scoped, tag = 'internal scratch']
  %s0 = inlined_call_operand.vmem [shape: f32[2,128,128], index: 0, kind: input, shape index: {}]
  %s1 = inlined_call_operand.vmem [shape: f32[2,128,1], index: 1, kind: input, shape index: {}]
  %s2 = inlined_call_operand.hbm [shape: f32[2,8,128], index: 2, kind: output, shape index: {}]
  %s3 = sld [smem:[#allocation0]]
  $region41: #{tpu_custom_call.1} parent=0
    _
  %s5 = ssub.s32 1, %s3
  %s6 = scalar_select 0, %s5, %s3
  $region1: #{tpu_custom_call.1} parent=0
    #allocation2 [shape = 'u8[8192]{0}', space=vmem, size = 0x2000, scoped, tag = 'output window, operand 0']
    #allocation3 [shape = 's32[2]{0}', space=sflag, size = 0x8, scoped, tag = 'scoped memory for tpu_custom_call.1']
    %7 = vsyncpa [#allocation3], 0
    %s8 = scalar_lea.sflag [#allocation3], 1
    %9 = vsyncpa %s8, 0
    loop: start=0, step=1, limit=4
    $region2: #{tpu_custom_call.1} parent=1 // loop_pre_header
      _
    $region3: #{tpu_custom_call.1} parent=1 // loop_header
      %s11 = sphi 0, %s15
      %p12 = scmp.ge.s32.totalorder %s11, 4
      %s21 = sphi 0, %s23
      %s24 = sphi 0, %s21
      %s25 = sphi 0, %s24
      %s41 = sphi 0, %s25
      %s47 = sphi 0, %s49
      %s50 = sphi 0, %s47
      %s51 = sphi 0, %s50
      %s67 = sphi 0, %s51
      %s73 = sphi 0, %s75
      %s76 = sphi 0, %s73
      %s77 = sphi 0, %s76
      %s93 = sphi 0, %s77
    $region4: #{tpu_custom_call.1} parent=1 // loop_header_branch
      %14 = sbr.rel (%p12) target = $region8
    $region5: #{tpu_custom_call.1} parent=1 // loop_body
      %s16 = ssub.s32 %s11, 1
      %s17 = ssub.s32 %s11, 2
      %s18 = sadd.s32 %s11, 1
      %s19 = ssub.s32 %s11, %s18
      %p20 = scmp.eq.s32.totalorder %s19, 0
      %s22 = sadd.s32 %s21, 1
      %s23 = scalar_select %p20, %s21, %s22
      %p26 = pneg %p20
      %p27 = scmp.eq.s32.totalorder %s11, 1
      %p28 = por %p26, %p27
      %p29 = scmp.ne.s32.totalorder %s21, %s24
      %p30 = scmp.eq.s32.totalorder %s11, 0
      %p31 = por %p29, %p30
      %p32 = scmp.ne.s32.totalorder %s21, %s24
      %p33 = scmp.eq.s32.totalorder %s16, 1
      %p34 = por %p32, %p33
      %p35 = scmp.ne.s32.totalorder %s24, %s25
      %p36 = scmp.eq.s32.totalorder %s16, 0
      %p37 = por %p35, %p36
      %p38 = scmp.ne.s32.totalorder %s24, %s25
      %p39 = scmp.eq.s32.totalorder %s17, 1
      %p40 = por %p38, %p39
      %p42 = scmp.ne.s32.totalorder %s25, %s41
      %p43 = scmp.eq.s32.totalorder %s17, 0
      %p44 = por %p42, %p43
      %s45 = ssub.s32 %s11, %s18
      %p46 = scmp.eq.s32.totalorder %s45, 0
      %s48 = sadd.s32 %s47, 1
      %s49 = scalar_select %p46, %s47, %s48
      %p52 = pneg %p46
      %p53 = scmp.eq.s32.totalorder %s11, 1
      %p54 = por %p52, %p53
      %p55 = scmp.ne.s32.totalorder %s47, %s50
      %p56 = scmp.eq.s32.totalorder %s11, 0
      %p57 = por %p55, %p56
      %p58 = scmp.ne.s32.totalorder %s47, %s50
      %p59 = scmp.eq.s32.totalorder %s16, 1
      %p60 = por %p58, %p59
      %p61 = scmp.ne.s32.totalorder %s50, %s51
      %p62 = scmp.eq.s32.totalorder %s16, 0
      %p63 = por %p61, %p62
      %p64 = scmp.ne.s32.totalorder %s50, %s51
      %p65 = scmp.eq.s32.totalorder %s17, 1
      %p66 = por %p64, %p65
      %p68 = scmp.ne.s32.totalorder %s51, %s67
      %p69 = scmp.eq.s32.totalorder %s17, 0
      %p70 = por %p68, %p69
      %s71 = ssub.s32 %s11, %s18
      %p72 = scmp.eq.s32.totalorder %s71, 0
      %s74 = sadd.s32 %s73, 1
      %s75 = scalar_select %p72, %s73, %s74
      %p78 = pneg %p72
      %p79 = scmp.eq.s32.totalorder %s11, 1
      %p80 = por %p78, %p79
      %p81 = scmp.ne.s32.totalorder %s73, %s76
      %p82 = scmp.eq.s32.totalorder %s11, 0
      %p83 = por %p81, %p82
      %p84 = scmp.ne.s32.totalorder %s73, %s76
      %p85 = scmp.eq.s32.totalorder %s16, 1
      %p86 = por %p84, %p85
      %p87 = scmp.ne.s32.totalorder %s76, %s77
      %p88 = scmp.eq.s32.totalorder %s16, 0
      %p89 = por %p87, %p88
      %p90 = scmp.ne.s32.totalorder %s76, %s77
      %p91 = scmp.eq.s32.totalorder %s17, 1
      %p92 = por %p90, %p91
      %p94 = scmp.ne.s32.totalorder %s77, %s93
      %p95 = scmp.eq.s32.totalorder %s17, 0
      %p96 = por %p94, %p95
      %p97 = scmp.le.s32.totalorder 1, %s11
      %p98 = scmp.lt.s32.totalorder %s11, 3
      %p99 = pnand %p97, %p98
      %p100 = pneg %p99
      // Predicated region
      $region9: #{tpu_custom_call.1} parent=5 // pred_check
        _
      $region10: #{tpu_custom_call.1} parent=5 // pred_check_branch
        %102 = sbr.rel (%p99) target = $region12
      $region11: #{tpu_custom_call.1} parent=5 // pred_region
        %s103 = ssub.s32 %s11, 1
      $region12: #{tpu_custom_call.1} parent=5 // pred_fallthru
        _
      %p104 = scmp.lt.s32.totalorder %s11, 2
      // Predicated region
      $region13: #{tpu_custom_call.1} parent=5 // pred_check
        %p105 = pneg %p104
      $region14: #{tpu_custom_call.1} parent=5 // pred_check_branch
        %107 = sbr.rel (%p105) target = $region16
      $region15: #{tpu_custom_call.1} parent=5 // pred_region
        // Predicated region
        $region17: #{tpu_custom_call.1} parent=15 // pred_check
          %p108 = pneg %p31
        $region18: #{tpu_custom_call.1} parent=15 // pred_check_branch
          %110 = sbr.rel (%p108) target = $region20
        $region19: #{tpu_custom_call.1} parent=15 // pred_region
          %p111 = scmp.lt.s32.totalorder %s11, 1
          %s112 = scalar_select %p111, %s11, 1
          %s113 = smul.addr %s112, 16
          %s114 = smul.addr %s113, 8
          %s115 = scalar_lea.vmem %s0, %s114
        $region20: #{tpu_custom_call.1} parent=15 // pred_fallthru
          _
        // Predicated region
        $region21: #{tpu_custom_call.1} parent=15 // pred_check
          %p116 = pneg %p57
        $region22: #{tpu_custom_call.1} parent=15 // pred_check_branch
          %118 = sbr.rel (%p116) target = $region24
        $region23: #{tpu_custom_call.1} parent=15 // pred_region
          %p119 = scmp.lt.s32.totalorder %s11, 1
          %s120 = scalar_select %p119, %s11, 1
          %s121 = smul.addr %s120, 16
          %s122 = smul.addr %s121, 8
          %s123 = scalar_lea.vmem %s1, %s122
        $region24: #{tpu_custom_call.1} parent=15 // pred_fallthru
          _
      $region16: #{tpu_custom_call.1} parent=5 // pred_fallthru
        _
      %p124 = scmp.le.s32.totalorder 1, %s11
      %p125 = scmp.lt.s32.totalorder %s11, 3
      %p126 = pnand %p124, %p125
      %p127 = pneg %p126
      // Predicated region
      $region25: #{tpu_custom_call.1} parent=5 // pred_check
        _
      $region26: #{tpu_custom_call.1} parent=5 // pred_check_branch
        %129 = sbr.rel (%p126) target = $region28
      $region27: #{tpu_custom_call.1} parent=5 // pred_region
        %s130 = ssub.s32 %s11, 1
        %p131 = scmp.lt.s32.totalorder %s16, 1
        %s132 = scalar_select %p131, %s16, 1
        %s133 = smul.addr %s132, 16
        %s134 = smul.addr %s133, 8
        %s135 = scalar_lea.vmem %s0, %s134
        %p136 = pneg %p37
        %p137 = pneg %p34
        %p138 = scmp.lt.s32.totalorder %s16, 1
        %s139 = scalar_select %p138, %s16, 1
        %s140 = smul.addr %s139, 16
        %s141 = smul.addr %s140, 8
        %s142 = scalar_lea.vmem %s1, %s141
        %p143 = pneg %p63
        %p144 = pneg %p60
        %p145 = pneg %p89
        %p146 = pneg %p86
        %s147 = sand.u32 %s76, 1
        %s148 = scalar_lea.sflag [#allocation3], %s147
        %s149 = sand.u32 %s76, 1
        %s150 = smul.addr %s149, 8
        %s151 = scalar_lea.vmem [#allocation2], %s150
        %p152 = scmp.lt.s32.totalorder %s16, 1
        %s153 = scalar_select %p152, %s16, 1
        %s154 = smul.addr %s153, 16
        %s155 = smul.addr %s154, 8
        %s156 = scalar_lea.vmem %s0, %s155
        %p157 = scmp.lt.s32.totalorder %s16, 1
        %s158 = scalar_select %p157, %s16, 1
        %s159 = smul.addr %s158, 16
        %s160 = smul.addr %s159, 8
        %s161 = scalar_lea.vmem %s1, %s160
        %v162 = vld [vmem:[%s156] sm:$0xff]
        %v163 = vld [vmem:[%s156 + $0x8] sm:$0xff]
        %v164 = vld [vmem:[%s156 + $0x10] sm:$0xff]
        %v165 = vld [vmem:[%s156 + $0x18] sm:$0xff]
        %v166 = vld [vmem:[%s156 + $0x20] sm:$0xff]
        %v167 = vld [vmem:[%s156 + $0x28] sm:$0xff]
        %v168 = vld [vmem:[%s156 + $0x30] sm:$0xff]
        %v169 = vld [vmem:[%s156 + $0x38] sm:$0xff]
        %v170 = vld [vmem:[%s156 + $0x40] sm:$0xff]
        %v171 = vld [vmem:[%s156 + $0x48] sm:$0xff]
        %v172 = vld [vmem:[%s156 + $0x50] sm:$0xff]
        %v173 = vld [vmem:[%s156 + $0x58] sm:$0xff]
        %v174 = vld [vmem:[%s156 + $0x60] sm:$0xff]
        %v175 = vld [vmem:[%s156 + $0x68] sm:$0xff]
        %v176 = vld [vmem:[%s156 + $0x70] sm:$0xff]
        %v177 = vld [vmem:[%s156 + $0x78] sm:$0xff]
        %v178 = vpack.c.bf16 %v163, %v162
        %v179 = vpack.c.bf16 %v165, %v164
        %v180 = vpack.c.bf16 %v167, %v166
        %v181 = vpack.c.bf16 %v169, %v168
        %v182 = vpack.c.bf16 %v171, %v170
        %v183 = vpack.c.bf16 %v173, %v172
        %v184 = vpack.c.bf16 %v175, %v174
        %v185 = vpack.c.bf16 %v177, %v176
        %186 = vmatpush.bf16.xpose.msra.mxu0 %v185
        %187 = vmatpush.bf16.xpose.msra.mxu0 %v184
        %188 = vmatpush.bf16.xpose.msra.mxu0 %v183
        %189 = vmatpush.bf16.xpose.msra.mxu0 %v182
        %190 = vmatpush.bf16.xpose.msra.mxu0 %v181
        %191 = vmatpush.bf16.xpose.msra.mxu0 %v180
        %192 = vmatpush.bf16.xpose.msra.mxu0 %v179
        %193 = vmatpush.bf16.xpose.msra.mxu0 %v178
        %194 = vmatmul.bf16.gmra.mxu0 %v178
        %v195 = vpop.f32.mrf.mxu0
        %v196 = vadd.f32 0.0, %v195
        %v197 = vpop.f32.mrf.mxu0
        %v198 = vadd.f32 0.0, %v197
        %199 = vmatmul.bf16.gmra.mxu0 %v179
        %v200 = vpop.f32.mrf.mxu0
        %v201 = vadd.f32 0.0, %v200
        %v202 = vpop.f32.mrf.mxu0
        %v203 = vadd.f32 0.0, %v202
        %204 = vmatmul.bf16.gmra.mxu0 %v180
        %v205 = vpop.f32.mrf.mxu0
        %v206 = vadd.f32 0.0, %v205
        %v207 = vpop.f32.mrf.mxu0
        %v208 = vadd.f32 0.0, %v207
        %209 = vmatmul.bf16.gmra.mxu0 %v181
        %v210 = vpop.f32.mrf.mxu0
        %v211 = vadd.f32 0.0, %v210
        %v212 = vpop.f32.mrf.mxu0
        %v213 = vadd.f32 0.0, %v212
        %214 = vmatmul.bf16.gmra.mxu0 %v182
        %v215 = vpop.f32.mrf.mxu0
        %v216 = vadd.f32 0.0, %v215
        %v217 = vpop.f32.mrf.mxu0
        %v218 = vadd.f32 0.0, %v217
        %219 = vmatmul.bf16.gmra.mxu0 %v183
        %v220 = vpop.f32.mrf.mxu0
        %v221 = vadd.f32 0.0, %v220
        %v222 = vpop.f32.mrf.mxu0
        %v223 = vadd.f32 0.0, %v222
        %224 = vmatmul.bf16.gmra.mxu0 %v184
        %v225 = vpop.f32.mrf.mxu0
        %v226 = vadd.f32 0.0, %v225
        %v227 = vpop.f32.mrf.mxu0
        %v228 = vadd.f32 0.0, %v227
        %229 = vmatmul.bf16.gmra.mxu0 %v185
        %v230 = vpop.f32.mrf.mxu0
        %v231 = vadd.f32 0.0, %v230
        %v232 = vpop.f32.mrf.mxu0
        %v233 = vadd.f32 0.0, %v232
        %234 = vdwg.mxu0
        %v235 = vmul.f32 %v162, %v162
        %v236 = vmul.f32 %v163, %v163
        %v237 = vmul.f32 %v164, %v164
        %v238 = vmul.f32 %v165, %v165
        %v239 = vmul.f32 %v166, %v166
        %v240 = vmul.f32 %v167, %v167
        %v241 = vmul.f32 %v168, %v168
        %v242 = vmul.f32 %v169, %v169
        %v243 = vmul.f32 %v170, %v170
        %v244 = vmul.f32 %v171, %v171
        %v245 = vmul.f32 %v172, %v172
        %v246 = vmul.f32 %v173, %v173
        %v247 = vmul.f32 %v174, %v174
        %v248 = vmul.f32 %v175, %v175
        %v249 = vmul.f32 %v176, %v176
        %v250 = vmul.f32 %v177, %v177
        %251 = vadd.xlane.f32.xlu0 %v235
        %v252 = vpop.xlane.xlu0 %251
        %253 = vadd.xlane.f32.xlu0 %v236
        %v254 = vpop.xlane.xlu0 %253
        %255 = vadd.xlane.f32.xlu0 %v237
        %v256 = vpop.xlane.xlu0 %255
        %257 = vadd.xlane.f32.xlu0 %v238
        %v258 = vpop.xlane.xlu0 %257
        %259 = vadd.xlane.f32.xlu0 %v239
        %v260 = vpop.xlane.xlu0 %259
        %261 = vadd.xlane.f32.xlu0 %v240
        %v262 = vpop.xlane.xlu0 %261
        %263 = vadd.xlane.f32.xlu0 %v241
        %v264 = vpop.xlane.xlu0 %263
        %265 = vadd.xlane.f32.xlu0 %v242
        %v266 = vpop.xlane.xlu0 %265
        %267 = vadd.xlane.f32.xlu0 %v243
        %v268 = vpop.xlane.xlu0 %267
        %269 = vadd.xlane.f32.xlu0 %v244
        %v270 = vpop.xlane.xlu0 %269
        %271 = vadd.xlane.f32.xlu0 %v245
        %v272 = vpop.xlane.xlu0 %271
        %273 = vadd.xlane.f32.xlu0 %v246
        %v274 = vpop.xlane.xlu0 %273
        %275 = vadd.xlane.f32.xlu0 %v247
        %v276 = vpop.xlane.xlu0 %275
        %277 = vadd.xlane.f32.xlu0 %v248
        %v278 = vpop.xlane.xlu0 %277
        %279 = vadd.xlane.f32.xlu0 %v249
        %v280 = vpop.xlane.xlu0 %279
        %281 = vadd.xlane.f32.xlu0 %v250
        %v282 = vpop.xlane.xlu0 %281
        %283 = vxpose.xlu0.b32.start [1/16] %v252, 128
        %284 = vxpose.xlu0.b32.cont [2/16] %v254, 128
        %285 = vxpose.xlu0.b32.cont [3/16] %v256, 128
        %286 = vxpose.xlu0.b32.cont [4/16] %v258, 128
        %287 = vxpose.xlu0.b32.cont [5/16] %v260, 128
        %288 = vxpose.xlu0.b32.cont [6/16] %v262, 128
        %289 = vxpose.xlu0.b32.cont [7/16] %v264, 128
        %290 = vxpose.xlu0.b32.cont [8/16] %v266, 128
        %291 = vxpose.xlu0.b32.cont [9/16] %v268, 128
        %292 = vxpose.xlu0.b32.cont [10/16] %v270, 128
        %293 = vxpose.xlu0.b32.cont [11/16] %v272, 128
        %294 = vxpose.xlu0.b32.cont [12/16] %v274, 128
        %295 = vxpose.xlu0.b32.cont [13/16] %v276, 128
        %296 = vxpose.xlu0.b32.cont [14/16] %v278, 128
        %297 = vxpose.xlu0.b32.cont [15/16] %v280, 128
        %298 = vxpose.xlu0.b32.end [16/16] %v282, 128
        %v299 = vpop.trf.xlu0
        %v300 = vpop.trf.xlu0
        %v301 = vpop.trf.xlu0
        %v302 = vpop.trf.xlu0
        %v303 = vpop.trf.xlu0
        %v304 = vpop.trf.xlu0
        %v305 = vpop.trf.xlu0
        %v306 = vpop.trf.xlu0
        %v307 = vpop.trf.xlu0
        %v308 = vpop.trf.xlu0
        %v309 = vpop.trf.xlu0
        %v310 = vpop.trf.xlu0
        %v311 = vpop.trf.xlu0
        %v312 = vpop.trf.xlu0
        %v313 = vpop.trf.xlu0
        %v314 = vpop.trf.xlu0
        %v315 = vperm.slane %v299, 0
        %v316 = vadd.f32 %v252, %v315
        %v317 = vadd.f32 %v254, %v315
        %v318 = vadd.f32 %v256, %v315
        %v319 = vadd.f32 %v258, %v315
        %v320 = vadd.f32 %v260, %v315
        %v321 = vadd.f32 %v262, %v315
        %v322 = vadd.f32 %v264, %v315
        %v323 = vadd.f32 %v266, %v315
        %v324 = vadd.f32 %v268, %v315
        %v325 = vadd.f32 %v270, %v315
        %v326 = vadd.f32 %v272, %v315
        %v327 = vadd.f32 %v274, %v315
        %v328 = vadd.f32 %v276, %v315
        %v329 = vadd.f32 %v278, %v315
        %v330 = vadd.f32 %v280, %v315
        %v331 = vadd.f32 %v282, %v315
        %v332 = vmul.f32 %v196, 2.0
        %v333 = vmul.f32 %v198, 2.0
        %v334 = vmul.f32 %v201, 2.0
        %v335 = vmul.f32 %v203, 2.0
        %v336 = vmul.f32 %v206, 2.0
        %v337 = vmul.f32 %v208, 2.0
        %v338 = vmul.f32 %v211, 2.0
        %v339 = vmul.f32 %v213, 2.0
        %v340 = vmul.f32 %v216, 2.0
        %v341 = vmul.f32 %v218, 2.0
        %v342 = vmul.f32 %v221, 2.0
        %v343 = vmul.f32 %v223, 2.0
        %v344 = vmul.f32 %v226, 2.0
        %v345 = vmul.f32 %v228, 2.0
        %v346 = vmul.f32 %v231, 2.0
        %v347 = vmul.f32 %v233, 2.0
        %v348 = vsub.f32 %v316, %v332
        %v349 = vsub.f32 %v317, %v333
        %v350 = vsub.f32 %v318, %v334
        %v351 = vsub.f32 %v319, %v335
        %v352 = vsub.f32 %v320, %v336
        %v353 = vsub.f32 %v321, %v337
        %v354 = vsub.f32 %v322, %v338
        %v355 = vsub.f32 %v323, %v339
        %v356 = vsub.f32 %v324, %v340
        %v357 = vsub.f32 %v325, %v341
        %v358 = vsub.f32 %v326, %v342
        %v359 = vsub.f32 %v327, %v343
        %v360 = vsub.f32 %v328, %v344
        %v361 = vsub.f32 %v329, %v345
        %v362 = vsub.f32 %v330, %v346
        %v363 = vsub.f32 %v331, %v347
        %v364 = vld [vmem:[%s161] sm:$0xff]
        %v365 = vld [vmem:[%s161 + $0x8] sm:$0xff]
        %v366 = vld [vmem:[%s161 + $0x10] sm:$0xff]
        %v367 = vld [vmem:[%s161 + $0x18] sm:$0xff]
        %v368 = vld [vmem:[%s161 + $0x20] sm:$0xff]
        %v369 = vld [vmem:[%s161 + $0x28] sm:$0xff]
        %v370 = vld [vmem:[%s161 + $0x30] sm:$0xff]
        %v371 = vld [vmem:[%s161 + $0x38] sm:$0xff]
        %v372 = vld [vmem:[%s161 + $0x40] sm:$0xff]
        %v373 = vld [vmem:[%s161 + $0x48] sm:$0xff]
        %v374 = vld [vmem:[%s161 + $0x50] sm:$0xff]
        %v375 = vld [vmem:[%s161 + $0x58] sm:$0xff]
        %v376 = vld [vmem:[%s161 + $0x60] sm:$0xff]
        %v377 = vld [vmem:[%s161 + $0x68] sm:$0xff]
        %v378 = vld [vmem:[%s161 + $0x70] sm:$0xff]
        %v379 = vld [vmem:[%s161 + $0x78] sm:$0xff]
        %380 = vxpose.xlu0.b32.start [1/16] %v364, 128
        %381 = vxpose.xlu0.b32.cont [2/16] %v365, 128
        %382 = vxpose.xlu0.b32.cont [3/16] %v366, 128
        %383 = vxpose.xlu0.b32.cont [4/16] %v367, 128
        %384 = vxpose.xlu0.b32.cont [5/16] %v368, 128
        %385 = vxpose.xlu0.b32.cont [6/16] %v369, 128
        %386 = vxpose.xlu0.b32.cont [7/16] %v370, 128
        %387 = vxpose.xlu0.b32.cont [8/16] %v371, 128
        %388 = vxpose.xlu0.b32.cont [9/16] %v372, 128
        %389 = vxpose.xlu0.b32.cont [10/16] %v373, 128
        %390 = vxpose.xlu0.b32.cont [11/16] %v374, 128
        %391 = vxpose.xlu0.b32.cont [12/16] %v375, 128
        %392 = vxpose.xlu0.b32.cont [13/16] %v376, 128
        %393 = vxpose.xlu0.b32.cont [14/16] %v377, 128
        %394 = vxpose.xlu0.b32.cont [15/16] %v378, 128
        %395 = vxpose.xlu0.b32.end [16/16] %v379, 128
        %v396 = vpop.trf.xlu0
        %v397 = vpop.trf.xlu0
        %v398 = vpop.trf.xlu0
        %v399 = vpop.trf.xlu0
        %v400 = vpop.trf.xlu0
        %v401 = vpop.trf.xlu0
        %v402 = vpop.trf.xlu0
        %v403 = vpop.trf.xlu0
        %v404 = vpop.trf.xlu0
        %v405 = vpop.trf.xlu0
        %v406 = vpop.trf.xlu0
        %v407 = vpop.trf.xlu0
        %v408 = vpop.trf.xlu0
        %v409 = vpop.trf.xlu0
        %v410 = vpop.trf.xlu0
        %v411 = vpop.trf.xlu0
        %413 = vset.pattern.permute.xlu0 0
        %414 = vperm.xlu0 %413, %v364
        %v415 = vpop.permute.xlu0 %414
        %418 = vset.pattern.permute.xlu0 0
        %419 = vperm.xlu0 %418, %v365
        %v420 = vpop.permute.xlu0 %419
        %423 = vset.pattern.permute.xlu0 0
        %424 = vperm.xlu0 %423, %v366
        %v425 = vpop.permute.xlu0 %424
        %428 = vset.pattern.permute.xlu0 0
        %429 = vperm.xlu0 %428, %v367
        %v430 = vpop.permute.xlu0 %429
        %433 = vset.pattern.permute.xlu0 0
        %434 = vperm.xlu0 %433, %v368
        %v435 = vpop.permute.xlu0 %434
        %438 = vset.pattern.permute.xlu0 0
        %439 = vperm.xlu0 %438, %v369
        %v440 = vpop.permute.xlu0 %439
        %443 = vset.pattern.permute.xlu0 0
        %444 = vperm.xlu0 %443, %v370
        %v445 = vpop.permute.xlu0 %444
        %448 = vset.pattern.permute.xlu0 0
        %449 = vperm.xlu0 %448, %v371
        %v450 = vpop.permute.xlu0 %449
        %453 = vset.pattern.permute.xlu0 0
        %454 = vperm.xlu0 %453, %v372
        %v455 = vpop.permute.xlu0 %454
        %458 = vset.pattern.permute.xlu0 0
        %459 = vperm.xlu0 %458, %v373
        %v460 = vpop.permute.xlu0 %459
        %463 = vset.pattern.permute.xlu0 0
        %464 = vperm.xlu0 %463, %v374
        %v465 = vpop.permute.xlu0 %464
        %468 = vset.pattern.permute.xlu0 0
        %469 = vperm.xlu0 %468, %v375
        %v470 = vpop.permute.xlu0 %469
        %473 = vset.pattern.permute.xlu0 0
        %474 = vperm.xlu0 %473, %v376
        %v475 = vpop.permute.xlu0 %474
        %478 = vset.pattern.permute.xlu0 0
        %479 = vperm.xlu0 %478, %v377
        %v480 = vpop.permute.xlu0 %479
        %483 = vset.pattern.permute.xlu0 0
        %484 = vperm.xlu0 %483, %v378
        %v485 = vpop.permute.xlu0 %484
        %488 = vset.pattern.permute.xlu0 0
        %489 = vperm.xlu0 %488, %v379
        %v490 = vpop.permute.xlu0 %489
        %v492 = vperm.slane %v396, 0
        %vm493 = vcmp.eq.f32.partialorder %v415, %v492
        %vm494 = vcmp.eq.f32.partialorder %v420, %v492
        %vm495 = vcmp.eq.f32.partialorder %v425, %v492
        %vm496 = vcmp.eq.f32.partialorder %v430, %v492
        %vm497 = vcmp.eq.f32.partialorder %v435, %v492
        %vm498 = vcmp.eq.f32.partialorder %v440, %v492
        %vm499 = vcmp.eq.f32.partialorder %v445, %v492
        %vm500 = vcmp.eq.f32.partialorder %v450, %v492
        %vm501 = vcmp.eq.f32.partialorder %v455, %v492
        %vm502 = vcmp.eq.f32.partialorder %v460, %v492
        %vm503 = vcmp.eq.f32.partialorder %v465, %v492
        %vm504 = vcmp.eq.f32.partialorder %v470, %v492
        %vm505 = vcmp.eq.f32.partialorder %v475, %v492
        %vm506 = vcmp.eq.f32.partialorder %v480, %v492
        %vm507 = vcmp.eq.f32.partialorder %v485, %v492
        %vm508 = vcmp.eq.f32.partialorder %v490, %v492
        %v509 = vlaneseq
        %v510 = vand.u32 %v509, 127
        %vm511 = vcmp.lt.s32.totalorder %v510, 8
        %v512 = vlaneseq
        %v513 = vshrl.u32 %v512, 7
        %v514 = vadd.s32 %v513, 8
        %v515 = vadd.s32 %v513, 16
        %v516 = vadd.s32 %v513, 24
        %v517 = vadd.s32 %v513, 32
        %v518 = vadd.s32 %v513, 40
        %v519 = vadd.s32 %v513, 48
        %v520 = vadd.s32 %v513, 56
        %v521 = vadd.s32 %v513, 64
        %v522 = vadd.s32 %v513, 72
        %v523 = vadd.s32 %v513, 80
        %v524 = vadd.s32 %v513, 88
        %v525 = vadd.s32 %v513, 96
        %v526 = vadd.s32 %v513, 104
        %v527 = vadd.s32 %v513, 112
        %v528 = vadd.s32 %v513, 120
        %vm529 = vcmp.lt.s32.totalorder %v513, 8
        %vm530 = vcmp.lt.s32.totalorder %v514, 8
        %vm531 = vcmp.lt.s32.totalorder %v515, 8
        %vm532 = vcmp.lt.s32.totalorder %v516, 8
        %vm533 = vcmp.lt.s32.totalorder %v517, 8
        %vm534 = vcmp.lt.s32.totalorder %v518, 8
        %vm535 = vcmp.lt.s32.totalorder %v519, 8
        %vm536 = vcmp.lt.s32.totalorder %v520, 8
        %vm537 = vcmp.lt.s32.totalorder %v521, 8
        %vm538 = vcmp.lt.s32.totalorder %v522, 8
        %vm539 = vcmp.lt.s32.totalorder %v523, 8
        %vm540 = vcmp.lt.s32.totalorder %v524, 8
        %vm541 = vcmp.lt.s32.totalorder %v525, 8
        %vm542 = vcmp.lt.s32.totalorder %v526, 8
        %vm543 = vcmp.lt.s32.totalorder %v527, 8
        %vm544 = vcmp.lt.s32.totalorder %v528, 8
        %vm545 = vmand %vm493, %vm511
        %vm546 = vmand %vm494, %vm511
        %vm547 = vmand %vm495, %vm511
        %vm548 = vmand %vm496, %vm511
        %vm549 = vmand %vm497, %vm511
        %vm550 = vmand %vm498, %vm511
        %vm551 = vmand %vm499, %vm511
        %vm552 = vmand %vm500, %vm511
        %vm553 = vmand %vm501, %vm511
        %vm554 = vmand %vm502, %vm511
        %vm555 = vmand %vm503, %vm511
        %vm556 = vmand %vm504, %vm511
        %vm557 = vmand %vm505, %vm511
        %vm558 = vmand %vm506, %vm511
        %vm559 = vmand %vm507, %vm511
        %vm560 = vmand %vm508, %vm511
        %v561 = vsel %vm545, %v348, -1e+30
        %v562 = vsel %vm546, %v349, -1e+30
        %v563 = vsel %vm547, %v350, -1e+30
        %v564 = vsel %vm548, %v351, -1e+30
        %v565 = vsel %vm549, %v352, -1e+30
        %v566 = vsel %vm550, %v353, -1e+30
        %v567 = vsel %vm551, %v354, -1e+30
        %v568 = vsel %vm552, %v355, -1e+30
        %v569 = vsel %vm553, %v356, -1e+30
        %v570 = vsel %vm554, %v357, -1e+30
        %v571 = vsel %vm555, %v358, -1e+30
        %v572 = vsel %vm556, %v359, -1e+30
        %v573 = vsel %vm557, %v360, -1e+30
        %v574 = vsel %vm558, %v361, -1e+30
        %v575 = vsel %vm559, %v362, -1e+30
        %v576 = vsel %vm560, %v363, -1e+30
        %577 = vmax.xlane.f32.xlu0 %v561
        %v578 = vpop.xlane.xlu0 %577
        %579 = vmax.xlane.f32.xlu0 %v562
        %v580 = vpop.xlane.xlu0 %579
        %581 = vmax.xlane.f32.xlu0 %v563
        %v582 = vpop.xlane.xlu0 %581
        %583 = vmax.xlane.f32.xlu0 %v564
        %v584 = vpop.xlane.xlu0 %583
        %585 = vmax.xlane.f32.xlu0 %v565
        %v586 = vpop.xlane.xlu0 %585
        %587 = vmax.xlane.f32.xlu0 %v566
        %v588 = vpop.xlane.xlu0 %587
        %589 = vmax.xlane.f32.xlu0 %v567
        %v590 = vpop.xlane.xlu0 %589
        %591 = vmax.xlane.f32.xlu0 %v568
        %v592 = vpop.xlane.xlu0 %591
        %593 = vmax.xlane.f32.xlu0 %v569
        %v594 = vpop.xlane.xlu0 %593
        %595 = vmax.xlane.f32.xlu0 %v570
        %v596 = vpop.xlane.xlu0 %595
        %597 = vmax.xlane.f32.xlu0 %v571
        %v598 = vpop.xlane.xlu0 %597
        %599 = vmax.xlane.f32.xlu0 %v572
        %v600 = vpop.xlane.xlu0 %599
        %601 = vmax.xlane.f32.xlu0 %v573
        %v602 = vpop.xlane.xlu0 %601
        %603 = vmax.xlane.f32.xlu0 %v574
        %v604 = vpop.xlane.xlu0 %603
        %605 = vmax.xlane.f32.xlu0 %v575
        %v606 = vpop.xlane.xlu0 %605
        %607 = vmax.xlane.f32.xlu0 %v576
        %v608 = vpop.xlane.xlu0 %607
        %vm609 = vmxor %vm493, 1
        %vm610 = vmxor %vm494, 1
        %vm611 = vmxor %vm495, 1
        %vm612 = vmxor %vm496, 1
        %vm613 = vmxor %vm497, 1
        %vm614 = vmxor %vm498, 1
        %vm615 = vmxor %vm499, 1
        %vm616 = vmxor %vm500, 1
        %vm617 = vmxor %vm501, 1
        %vm618 = vmxor %vm502, 1
        %vm619 = vmxor %vm503, 1
        %vm620 = vmxor %vm504, 1
        %vm621 = vmxor %vm505, 1
        %vm622 = vmxor %vm506, 1
        %vm623 = vmxor %vm507, 1
        %vm624 = vmxor %vm508, 1
        %vm625 = vmand %vm609, %vm511
        %vm626 = vmand %vm610, %vm511
        %vm627 = vmand %vm611, %vm511
        %vm628 = vmand %vm612, %vm511
        %vm629 = vmand %vm613, %vm511
        %vm630 = vmand %vm614, %vm511
        %vm631 = vmand %vm615, %vm511
        %vm632 = vmand %vm616, %vm511
        %vm633 = vmand %vm617, %vm511
        %vm634 = vmand %vm618, %vm511
        %vm635 = vmand %vm619, %vm511
        %vm636 = vmand %vm620, %vm511
        %vm637 = vmand %vm621, %vm511
        %vm638 = vmand %vm622, %vm511
        %vm639 = vmand %vm623, %vm511
        %vm640 = vmand %vm624, %vm511
        %v641 = vsel %vm625, %v348, 1e+30
        %v642 = vsel %vm626, %v349, 1e+30
        %v643 = vsel %vm627, %v350, 1e+30
        %v644 = vsel %vm628, %v351, 1e+30
        %v645 = vsel %vm629, %v352, 1e+30
        %v646 = vsel %vm630, %v353, 1e+30
        %v647 = vsel %vm631, %v354, 1e+30
        %v648 = vsel %vm632, %v355, 1e+30
        %v649 = vsel %vm633, %v356, 1e+30
        %v650 = vsel %vm634, %v357, 1e+30
        %v651 = vsel %vm635, %v358, 1e+30
        %v652 = vsel %vm636, %v359, 1e+30
        %v653 = vsel %vm637, %v360, 1e+30
        %v654 = vsel %vm638, %v361, 1e+30
        %v655 = vsel %vm639, %v362, 1e+30
        %v656 = vsel %vm640, %v363, 1e+30
        %657 = vmin.xlane.f32.xlu0 %v641
        %v658 = vpop.xlane.xlu0 %657
        %659 = vmin.xlane.f32.xlu0 %v642
        %v660 = vpop.xlane.xlu0 %659
        %661 = vmin.xlane.f32.xlu0 %v643
        %v662 = vpop.xlane.xlu0 %661
        %663 = vmin.xlane.f32.xlu0 %v644
        %v664 = vpop.xlane.xlu0 %663
        %665 = vmin.xlane.f32.xlu0 %v645
        %v666 = vpop.xlane.xlu0 %665
        %667 = vmin.xlane.f32.xlu0 %v646
        %v668 = vpop.xlane.xlu0 %667
        %669 = vmin.xlane.f32.xlu0 %v647
        %v670 = vpop.xlane.xlu0 %669
        %671 = vmin.xlane.f32.xlu0 %v648
        %v672 = vpop.xlane.xlu0 %671
        %673 = vmin.xlane.f32.xlu0 %v649
        %v674 = vpop.xlane.xlu0 %673
        %675 = vmin.xlane.f32.xlu0 %v650
        %v676 = vpop.xlane.xlu0 %675
        %677 = vmin.xlane.f32.xlu0 %v651
        %v678 = vpop.xlane.xlu0 %677
        %679 = vmin.xlane.f32.xlu0 %v652
        %v680 = vpop.xlane.xlu0 %679
        %681 = vmin.xlane.f32.xlu0 %v653
        %v682 = vpop.xlane.xlu0 %681
        %683 = vmin.xlane.f32.xlu0 %v654
        %v684 = vpop.xlane.xlu0 %683
        %685 = vmin.xlane.f32.xlu0 %v655
        %v686 = vpop.xlane.xlu0 %685
        %687 = vmin.xlane.f32.xlu0 %v656
        %v688 = vpop.xlane.xlu0 %687
        %v689 = vmax.f32 %v578, 1e-12
        %v690 = vmax.f32 %v580, 1e-12
        %v691 = vmax.f32 %v582, 1e-12
        %v692 = vmax.f32 %v584, 1e-12
        %v693 = vmax.f32 %v586, 1e-12
        %v694 = vmax.f32 %v588, 1e-12
        %v695 = vmax.f32 %v590, 1e-12
        %v696 = vmax.f32 %v592, 1e-12
        %v697 = vmax.f32 %v594, 1e-12
        %v698 = vmax.f32 %v596, 1e-12
        %v699 = vmax.f32 %v598, 1e-12
        %v700 = vmax.f32 %v600, 1e-12
        %v701 = vmax.f32 %v602, 1e-12
        %v702 = vmax.f32 %v604, 1e-12
        %v703 = vmax.f32 %v606, 1e-12
        %v704 = vmax.f32 %v608, 1e-12
        %v705 = vrsqrt.pop %v689
        %v706 = vmul.f32 %v705, %v689
        %v707 = vmul.f32 %v706, %v705
        %v708 = vmul.f32 0.5, %v707
        %v709 = vsub.f32 1.5, %v708
        %v710 = vmul.f32 %v705, %v709
        %v711 = vmul.f32 %v689, %v710
        %vm712 = vcmp.eq.f32.partialorder %v689, inf
        %v713 = vsel %vm712, %v689, %v711
        %vm714 = vcmp.eq.f32.partialorder %v689, 0.0
        %v715 = vand.u32 %v689, 2147483648
        %v716 = vsel %vm714, %v715, %v713
        %v717 = vrsqrt.pop %v690
        %v718 = vmul.f32 %v717, %v690
        %v719 = vmul.f32 %v718, %v717
        %v720 = vmul.f32 0.5, %v719
        %v721 = vsub.f32 1.5, %v720
        %v722 = vmul.f32 %v717, %v721
        %v723 = vmul.f32 %v690, %v722
        %vm724 = vcmp.eq.f32.partialorder %v690, inf
        %v725 = vsel %vm724, %v690, %v723
        %vm726 = vcmp.eq.f32.partialorder %v690, 0.0
        %v727 = vand.u32 %v690, 2147483648
        %v728 = vsel %vm726, %v727, %v725
        %v729 = vrsqrt.pop %v691
        %v730 = vmul.f32 %v729, %v691
        %v731 = vmul.f32 %v730, %v729
        %v732 = vmul.f32 0.5, %v731
        %v733 = vsub.f32 1.5, %v732
        %v734 = vmul.f32 %v729, %v733
        %v735 = vmul.f32 %v691, %v734
        %vm736 = vcmp.eq.f32.partialorder %v691, inf
        %v737 = vsel %vm736, %v691, %v735
        %vm738 = vcmp.eq.f32.partialorder %v691, 0.0
        %v739 = vand.u32 %v691, 2147483648
        %v740 = vsel %vm738, %v739, %v737
        %v741 = vrsqrt.pop %v692
        %v742 = vmul.f32 %v741, %v692
        %v743 = vmul.f32 %v742, %v741
        %v744 = vmul.f32 0.5, %v743
        %v745 = vsub.f32 1.5, %v744
        %v746 = vmul.f32 %v741, %v745
        %v747 = vmul.f32 %v692, %v746
        %vm748 = vcmp.eq.f32.partialorder %v692, inf
        %v749 = vsel %vm748, %v692, %v747
        %vm750 = vcmp.eq.f32.partialorder %v692, 0.0
        %v751 = vand.u32 %v692, 2147483648
        %v752 = vsel %vm750, %v751, %v749
        %v753 = vrsqrt.pop %v693
        %v754 = vmul.f32 %v753, %v693
        %v755 = vmul.f32 %v754, %v753
        %v756 = vmul.f32 0.5, %v755
        %v757 = vsub.f32 1.5, %v756
        %v758 = vmul.f32 %v753, %v757
        %v759 = vmul.f32 %v693, %v758
        %vm760 = vcmp.eq.f32.partialorder %v693, inf
        %v761 = vsel %vm760, %v693, %v759
        %vm762 = vcmp.eq.f32.partialorder %v693, 0.0
        %v763 = vand.u32 %v693, 2147483648
        %v764 = vsel %vm762, %v763, %v761
        %v765 = vrsqrt.pop %v694
        %v766 = vmul.f32 %v765, %v694
        %v767 = vmul.f32 %v766, %v765
        %v768 = vmul.f32 0.5, %v767
        %v769 = vsub.f32 1.5, %v768
        %v770 = vmul.f32 %v765, %v769
        %v771 = vmul.f32 %v694, %v770
        %vm772 = vcmp.eq.f32.partialorder %v694, inf
        %v773 = vsel %vm772, %v694, %v771
        %vm774 = vcmp.eq.f32.partialorder %v694, 0.0
        %v775 = vand.u32 %v694, 2147483648
        %v776 = vsel %vm774, %v775, %v773
        %v777 = vrsqrt.pop %v695
        %v778 = vmul.f32 %v777, %v695
        %v779 = vmul.f32 %v778, %v777
        %v780 = vmul.f32 0.5, %v779
        %v781 = vsub.f32 1.5, %v780
        %v782 = vmul.f32 %v777, %v781
        %v783 = vmul.f32 %v695, %v782
        %vm784 = vcmp.eq.f32.partialorder %v695, inf
        %v785 = vsel %vm784, %v695, %v783
        %vm786 = vcmp.eq.f32.partialorder %v695, 0.0
        %v787 = vand.u32 %v695, 2147483648
        %v788 = vsel %vm786, %v787, %v785
        %v789 = vrsqrt.pop %v696
        %v790 = vmul.f32 %v789, %v696
        %v791 = vmul.f32 %v790, %v789
        %v792 = vmul.f32 0.5, %v791
        %v793 = vsub.f32 1.5, %v792
        %v794 = vmul.f32 %v789, %v793
        %v795 = vmul.f32 %v696, %v794
        %vm796 = vcmp.eq.f32.partialorder %v696, inf
        %v797 = vsel %vm796, %v696, %v795
        %vm798 = vcmp.eq.f32.partialorder %v696, 0.0
        %v799 = vand.u32 %v696, 2147483648
        %v800 = vsel %vm798, %v799, %v797
        %v801 = vrsqrt.pop %v697
        %v802 = vmul.f32 %v801, %v697
        %v803 = vmul.f32 %v802, %v801
        %v804 = vmul.f32 0.5, %v803
        %v805 = vsub.f32 1.5, %v804
        %v806 = vmul.f32 %v801, %v805
        %v807 = vmul.f32 %v697, %v806
        %vm808 = vcmp.eq.f32.partialorder %v697, inf
        %v809 = vsel %vm808, %v697, %v807
        %vm810 = vcmp.eq.f32.partialorder %v697, 0.0
        %v811 = vand.u32 %v697, 2147483648
        %v812 = vsel %vm810, %v811, %v809
        %v813 = vrsqrt.pop %v698
        %v814 = vmul.f32 %v813, %v698
        %v815 = vmul.f32 %v814, %v813
        %v816 = vmul.f32 0.5, %v815
        %v817 = vsub.f32 1.5, %v816
        %v818 = vmul.f32 %v813, %v817
        %v819 = vmul.f32 %v698, %v818
        %vm820 = vcmp.eq.f32.partialorder %v698, inf
        %v821 = vsel %vm820, %v698, %v819
        %vm822 = vcmp.eq.f32.partialorder %v698, 0.0
        %v823 = vand.u32 %v698, 2147483648
        %v824 = vsel %vm822, %v823, %v821
        %v825 = vrsqrt.pop %v699
        %v826 = vmul.f32 %v825, %v699
        %v827 = vmul.f32 %v826, %v825
        %v828 = vmul.f32 0.5, %v827
        %v829 = vsub.f32 1.5, %v828
        %v830 = vmul.f32 %v825, %v829
        %v831 = vmul.f32 %v699, %v830
        %vm832 = vcmp.eq.f32.partialorder %v699, inf
        %v833 = vsel %vm832, %v699, %v831
        %vm834 = vcmp.eq.f32.partialorder %v699, 0.0
        %v835 = vand.u32 %v699, 2147483648
        %v836 = vsel %vm834, %v835, %v833
        %v837 = vrsqrt.pop %v700
        %v838 = vmul.f32 %v837, %v700
        %v839 = vmul.f32 %v838, %v837
        %v840 = vmul.f32 0.5, %v839
        %v841 = vsub.f32 1.5, %v840
        %v842 = vmul.f32 %v837, %v841
        %v843 = vmul.f32 %v700, %v842
        %vm844 = vcmp.eq.f32.partialorder %v700, inf
        %v845 = vsel %vm844, %v700, %v843
        %vm846 = vcmp.eq.f32.partialorder %v700, 0.0
        %v847 = vand.u32 %v700, 2147483648
        %v848 = vsel %vm846, %v847, %v845
        %v849 = vrsqrt.pop %v701
        %v850 = vmul.f32 %v849, %v701
        %v851 = vmul.f32 %v850, %v849
        %v852 = vmul.f32 0.5, %v851
        %v853 = vsub.f32 1.5, %v852
        %v854 = vmul.f32 %v849, %v853
        %v855 = vmul.f32 %v701, %v854
        %vm856 = vcmp.eq.f32.partialorder %v701, inf
        %v857 = vsel %vm856, %v701, %v855
        %vm858 = vcmp.eq.f32.partialorder %v701, 0.0
        %v859 = vand.u32 %v701, 2147483648
        %v860 = vsel %vm858, %v859, %v857
        %v861 = vrsqrt.pop %v702
        %v862 = vmul.f32 %v861, %v702
        %v863 = vmul.f32 %v862, %v861
        %v864 = vmul.f32 0.5, %v863
        %v865 = vsub.f32 1.5, %v864
        %v866 = vmul.f32 %v861, %v865
        %v867 = vmul.f32 %v702, %v866
        %vm868 = vcmp.eq.f32.partialorder %v702, inf
        %v869 = vsel %vm868, %v702, %v867
        %vm870 = vcmp.eq.f32.partialorder %v702, 0.0
        %v871 = vand.u32 %v702, 2147483648
        %v872 = vsel %vm870, %v871, %v869
        %v873 = vrsqrt.pop %v703
        %v874 = vmul.f32 %v873, %v703
        %v875 = vmul.f32 %v874, %v873
        %v876 = vmul.f32 0.5, %v875
        %v877 = vsub.f32 1.5, %v876
        %v878 = vmul.f32 %v873, %v877
        %v879 = vmul.f32 %v703, %v878
        %vm880 = vcmp.eq.f32.partialorder %v703, inf
        %v881 = vsel %vm880, %v703, %v879
        %vm882 = vcmp.eq.f32.partialorder %v703, 0.0
        %v883 = vand.u32 %v703, 2147483648
        %v884 = vsel %vm882, %v883, %v881
        %v885 = vrsqrt.pop %v704
        %v886 = vmul.f32 %v885, %v704
        %v887 = vmul.f32 %v886, %v885
        %v888 = vmul.f32 0.5, %v887
        %v889 = vsub.f32 1.5, %v888
        %v890 = vmul.f32 %v885, %v889
        %v891 = vmul.f32 %v704, %v890
        %vm892 = vcmp.eq.f32.partialorder %v704, inf
        %v893 = vsel %vm892, %v704, %v891
        %vm894 = vcmp.eq.f32.partialorder %v704, 0.0
        %v895 = vand.u32 %v704, 2147483648
        %v896 = vsel %vm894, %v895, %v893
        %v897 = vmax.f32 %v658, 1e-12
        %v898 = vmax.f32 %v660, 1e-12
        %v899 = vmax.f32 %v662, 1e-12
        %v900 = vmax.f32 %v664, 1e-12
        %v901 = vmax.f32 %v666, 1e-12
        %v902 = vmax.f32 %v668, 1e-12
        %v903 = vmax.f32 %v670, 1e-12
        %v904 = vmax.f32 %v672, 1e-12
        %v905 = vmax.f32 %v674, 1e-12
        %v906 = vmax.f32 %v676, 1e-12
        %v907 = vmax.f32 %v678, 1e-12
        %v908 = vmax.f32 %v680, 1e-12
        %v909 = vmax.f32 %v682, 1e-12
        %v910 = vmax.f32 %v684, 1e-12
        %v911 = vmax.f32 %v686, 1e-12
        %v912 = vmax.f32 %v688, 1e-12
        %v913 = vrsqrt.pop %v897
        %v914 = vmul.f32 %v913, %v897
        %v915 = vmul.f32 %v914, %v913
        %v916 = vmul.f32 0.5, %v915
        %v917 = vsub.f32 1.5, %v916
        %v918 = vmul.f32 %v913, %v917
        %v919 = vmul.f32 %v897, %v918
        %vm920 = vcmp.eq.f32.partialorder %v897, inf
        %v921 = vsel %vm920, %v897, %v919
        %vm922 = vcmp.eq.f32.partialorder %v897, 0.0
        %v923 = vand.u32 %v897, 2147483648
        %v924 = vsel %vm922, %v923, %v921
        %v925 = vrsqrt.pop %v898
        %v926 = vmul.f32 %v925, %v898
        %v927 = vmul.f32 %v926, %v925
        %v928 = vmul.f32 0.5, %v927
        %v929 = vsub.f32 1.5, %v928
        %v930 = vmul.f32 %v925, %v929
        %v931 = vmul.f32 %v898, %v930
        %vm932 = vcmp.eq.f32.partialorder %v898, inf
        %v933 = vsel %vm932, %v898, %v931
        %vm934 = vcmp.eq.f32.partialorder %v898, 0.0
        %v935 = vand.u32 %v898, 2147483648
        %v936 = vsel %vm934, %v935, %v933
        %v937 = vrsqrt.pop %v899
        %v938 = vmul.f32 %v937, %v899
        %v939 = vmul.f32 %v938, %v937
        %v940 = vmul.f32 0.5, %v939
        %v941 = vsub.f32 1.5, %v940
        %v942 = vmul.f32 %v937, %v941
        %v943 = vmul.f32 %v899, %v942
        %vm944 = vcmp.eq.f32.partialorder %v899, inf
        %v945 = vsel %vm944, %v899, %v943
        %vm946 = vcmp.eq.f32.partialorder %v899, 0.0
        %v947 = vand.u32 %v899, 2147483648
        %v948 = vsel %vm946, %v947, %v945
        %v949 = vrsqrt.pop %v900
        %v950 = vmul.f32 %v949, %v900
        %v951 = vmul.f32 %v950, %v949
        %v952 = vmul.f32 0.5, %v951
        %v953 = vsub.f32 1.5, %v952
        %v954 = vmul.f32 %v949, %v953
        %v955 = vmul.f32 %v900, %v954
        %vm956 = vcmp.eq.f32.partialorder %v900, inf
        %v957 = vsel %vm956, %v900, %v955
        %vm958 = vcmp.eq.f32.partialorder %v900, 0.0
        %v959 = vand.u32 %v900, 2147483648
        %v960 = vsel %vm958, %v959, %v957
        %v961 = vrsqrt.pop %v901
        %v962 = vmul.f32 %v961, %v901
        %v963 = vmul.f32 %v962, %v961
        %v964 = vmul.f32 0.5, %v963
        %v965 = vsub.f32 1.5, %v964
        %v966 = vmul.f32 %v961, %v965
        %v967 = vmul.f32 %v901, %v966
        %vm968 = vcmp.eq.f32.partialorder %v901, inf
        %v969 = vsel %vm968, %v901, %v967
        %vm970 = vcmp.eq.f32.partialorder %v901, 0.0
        %v971 = vand.u32 %v901, 2147483648
        %v972 = vsel %vm970, %v971, %v969
        %v973 = vrsqrt.pop %v902
        %v974 = vmul.f32 %v973, %v902
        %v975 = vmul.f32 %v974, %v973
        %v976 = vmul.f32 0.5, %v975
        %v977 = vsub.f32 1.5, %v976
        %v978 = vmul.f32 %v973, %v977
        %v979 = vmul.f32 %v902, %v978
        %vm980 = vcmp.eq.f32.partialorder %v902, inf
        %v981 = vsel %vm980, %v902, %v979
        %vm982 = vcmp.eq.f32.partialorder %v902, 0.0
        %v983 = vand.u32 %v902, 2147483648
        %v984 = vsel %vm982, %v983, %v981
        %v985 = vrsqrt.pop %v903
        %v986 = vmul.f32 %v985, %v903
        %v987 = vmul.f32 %v986, %v985
        %v988 = vmul.f32 0.5, %v987
        %v989 = vsub.f32 1.5, %v988
        %v990 = vmul.f32 %v985, %v989
        %v991 = vmul.f32 %v903, %v990
        %vm992 = vcmp.eq.f32.partialorder %v903, inf
        %v993 = vsel %vm992, %v903, %v991
        %vm994 = vcmp.eq.f32.partialorder %v903, 0.0
        %v995 = vand.u32 %v903, 2147483648
        %v996 = vsel %vm994, %v995, %v993
        %v997 = vrsqrt.pop %v904
        %v998 = vmul.f32 %v997, %v904
        %v999 = vmul.f32 %v998, %v997
        %v1000 = vmul.f32 0.5, %v999
        %v1001 = vsub.f32 1.5, %v1000
        %v1002 = vmul.f32 %v997, %v1001
        %v1003 = vmul.f32 %v904, %v1002
        %vm1004 = vcmp.eq.f32.partialorder %v904, inf
        %v1005 = vsel %vm1004, %v904, %v1003
        %vm1006 = vcmp.eq.f32.partialorder %v904, 0.0
        %v1007 = vand.u32 %v904, 2147483648
        %v1008 = vsel %vm1006, %v1007, %v1005
        %v1009 = vrsqrt.pop %v905
        %v1010 = vmul.f32 %v1009, %v905
        %v1011 = vmul.f32 %v1010, %v1009
        %v1012 = vmul.f32 0.5, %v1011
        %v1013 = vsub.f32 1.5, %v1012
        %v1014 = vmul.f32 %v1009, %v1013
        %v1015 = vmul.f32 %v905, %v1014
        %vm1016 = vcmp.eq.f32.partialorder %v905, inf
        %v1017 = vsel %vm1016, %v905, %v1015
        %vm1018 = vcmp.eq.f32.partialorder %v905, 0.0
        %v1019 = vand.u32 %v905, 2147483648
        %v1020 = vsel %vm1018, %v1019, %v1017
        %v1021 = vrsqrt.pop %v906
        %v1022 = vmul.f32 %v1021, %v906
        %v1023 = vmul.f32 %v1022, %v1021
        %v1024 = vmul.f32 0.5, %v1023
        %v1025 = vsub.f32 1.5, %v1024
        %v1026 = vmul.f32 %v1021, %v1025
        %v1027 = vmul.f32 %v906, %v1026
        %vm1028 = vcmp.eq.f32.partialorder %v906, inf
        %v1029 = vsel %vm1028, %v906, %v1027
        %vm1030 = vcmp.eq.f32.partialorder %v906, 0.0
        %v1031 = vand.u32 %v906, 2147483648
        %v1032 = vsel %vm1030, %v1031, %v1029
        %v1033 = vrsqrt.pop %v907
        %v1034 = vmul.f32 %v1033, %v907
        %v1035 = vmul.f32 %v1034, %v1033
        %v1036 = vmul.f32 0.5, %v1035
        %v1037 = vsub.f32 1.5, %v1036
        %v1038 = vmul.f32 %v1033, %v1037
        %v1039 = vmul.f32 %v907, %v1038
        %vm1040 = vcmp.eq.f32.partialorder %v907, inf
        %v1041 = vsel %vm1040, %v907, %v1039
        %vm1042 = vcmp.eq.f32.partialorder %v907, 0.0
        %v1043 = vand.u32 %v907, 2147483648
        %v1044 = vsel %vm1042, %v1043, %v1041
        %v1045 = vrsqrt.pop %v908
        %v1046 = vmul.f32 %v1045, %v908
        %v1047 = vmul.f32 %v1046, %v1045
        %v1048 = vmul.f32 0.5, %v1047
        %v1049 = vsub.f32 1.5, %v1048
        %v1050 = vmul.f32 %v1045, %v1049
        %v1051 = vmul.f32 %v908, %v1050
        %vm1052 = vcmp.eq.f32.partialorder %v908, inf
        %v1053 = vsel %vm1052, %v908, %v1051
        %vm1054 = vcmp.eq.f32.partialorder %v908, 0.0
        %v1055 = vand.u32 %v908, 2147483648
        %v1056 = vsel %vm1054, %v1055, %v1053
        %v1057 = vrsqrt.pop %v909
        %v1058 = vmul.f32 %v1057, %v909
        %v1059 = vmul.f32 %v1058, %v1057
        %v1060 = vmul.f32 0.5, %v1059
        %v1061 = vsub.f32 1.5, %v1060
        %v1062 = vmul.f32 %v1057, %v1061
        %v1063 = vmul.f32 %v909, %v1062
        %vm1064 = vcmp.eq.f32.partialorder %v909, inf
        %v1065 = vsel %vm1064, %v909, %v1063
        %vm1066 = vcmp.eq.f32.partialorder %v909, 0.0
        %v1067 = vand.u32 %v909, 2147483648
        %v1068 = vsel %vm1066, %v1067, %v1065
        %v1069 = vrsqrt.pop %v910
        %v1070 = vmul.f32 %v1069, %v910
        %v1071 = vmul.f32 %v1070, %v1069
        %v1072 = vmul.f32 0.5, %v1071
        %v1073 = vsub.f32 1.5, %v1072
        %v1074 = vmul.f32 %v1069, %v1073
        %v1075 = vmul.f32 %v910, %v1074
        %vm1076 = vcmp.eq.f32.partialorder %v910, inf
        %v1077 = vsel %vm1076, %v910, %v1075
        %vm1078 = vcmp.eq.f32.partialorder %v910, 0.0
        %v1079 = vand.u32 %v910, 2147483648
        %v1080 = vsel %vm1078, %v1079, %v1077
        %v1081 = vrsqrt.pop %v911
        %v1082 = vmul.f32 %v1081, %v911
        %v1083 = vmul.f32 %v1082, %v1081
        %v1084 = vmul.f32 0.5, %v1083
        %v1085 = vsub.f32 1.5, %v1084
        %v1086 = vmul.f32 %v1081, %v1085
        %v1087 = vmul.f32 %v911, %v1086
        %vm1088 = vcmp.eq.f32.partialorder %v911, inf
        %v1089 = vsel %vm1088, %v911, %v1087
        %vm1090 = vcmp.eq.f32.partialorder %v911, 0.0
        %v1091 = vand.u32 %v911, 2147483648
        %v1092 = vsel %vm1090, %v1091, %v1089
        %v1093 = vrsqrt.pop %v912
        %v1094 = vmul.f32 %v1093, %v912
        %v1095 = vmul.f32 %v1094, %v1093
        %v1096 = vmul.f32 0.5, %v1095
        %v1097 = vsub.f32 1.5, %v1096
        %v1098 = vmul.f32 %v1093, %v1097
        %v1099 = vmul.f32 %v912, %v1098
        %vm1100 = vcmp.eq.f32.partialorder %v912, inf
        %v1101 = vsel %vm1100, %v912, %v1099
        %vm1102 = vcmp.eq.f32.partialorder %v912, 0.0
        %v1103 = vand.u32 %v912, 2147483648
        %v1104 = vsel %vm1102, %v1103, %v1101
        %v1105 = vsub.f32 %v716, %v924
        %v1106 = vsub.f32 %v728, %v936
        %v1107 = vsub.f32 %v740, %v948
        %v1108 = vsub.f32 %v752, %v960
        %v1109 = vsub.f32 %v764, %v972
        %v1110 = vsub.f32 %v776, %v984
        %v1111 = vsub.f32 %v788, %v996
        %v1112 = vsub.f32 %v800, %v1008
        %v1113 = vsub.f32 %v812, %v1020
        %v1114 = vsub.f32 %v824, %v1032
        %v1115 = vsub.f32 %v836, %v1044
        %v1116 = vsub.f32 %v848, %v1056
        %v1117 = vsub.f32 %v860, %v1068
        %v1118 = vsub.f32 %v872, %v1080
        %v1119 = vsub.f32 %v884, %v1092
        %v1120 = vsub.f32 %v896, %v1104
        %v1121 = vmax.f32 %v1105, 0.0
        %v1122 = vmax.f32 %v1106, 0.0
        %v1123 = vmax.f32 %v1107, 0.0
        %v1124 = vmax.f32 %v1108, 0.0
        %v1125 = vmax.f32 %v1109, 0.0
        %v1126 = vmax.f32 %v1110, 0.0
        %v1127 = vmax.f32 %v1111, 0.0
        %v1128 = vmax.f32 %v1112, 0.0
        %v1129 = vmax.f32 %v1113, 0.0
        %v1130 = vmax.f32 %v1114, 0.0
        %v1131 = vmax.f32 %v1115, 0.0
        %v1132 = vmax.f32 %v1116, 0.0
        %v1133 = vmax.f32 %v1117, 0.0
        %v1134 = vmax.f32 %v1118, 0.0
        %v1135 = vmax.f32 %v1119, 0.0
        %v1136 = vmax.f32 %v1120, 0.0
        %vm1137 = vcmp.ne.f32.partialorder %v1105, %v1105
        %vm1138 = vcmp.ne.f32.partialorder %v1106, %v1106
        %vm1139 = vcmp.ne.f32.partialorder %v1107, %v1107
        %vm1140 = vcmp.ne.f32.partialorder %v1108, %v1108
        %vm1141 = vcmp.ne.f32.partialorder %v1109, %v1109
        %vm1142 = vcmp.ne.f32.partialorder %v1110, %v1110
        %vm1143 = vcmp.ne.f32.partialorder %v1111, %v1111
        %vm1144 = vcmp.ne.f32.partialorder %v1112, %v1112
        %vm1145 = vcmp.ne.f32.partialorder %v1113, %v1113
        %vm1146 = vcmp.ne.f32.partialorder %v1114, %v1114
        %vm1147 = vcmp.ne.f32.partialorder %v1115, %v1115
        %vm1148 = vcmp.ne.f32.partialorder %v1116, %v1116
        %vm1149 = vcmp.ne.f32.partialorder %v1117, %v1117
        %vm1150 = vcmp.ne.f32.partialorder %v1118, %v1118
        %vm1151 = vcmp.ne.f32.partialorder %v1119, %v1119
        %vm1152 = vcmp.ne.f32.partialorder %v1120, %v1120
        %v1153 = vadd.f32 %v1105, 0.0
        %v1154 = vadd.f32 %v1106, 0.0
        %v1155 = vadd.f32 %v1107, 0.0
        %v1156 = vadd.f32 %v1108, 0.0
        %v1157 = vadd.f32 %v1109, 0.0
        %v1158 = vadd.f32 %v1110, 0.0
        %v1159 = vadd.f32 %v1111, 0.0
        %v1160 = vadd.f32 %v1112, 0.0
        %v1161 = vadd.f32 %v1113, 0.0
        %v1162 = vadd.f32 %v1114, 0.0
        %v1163 = vadd.f32 %v1115, 0.0
        %v1164 = vadd.f32 %v1116, 0.0
        %v1165 = vadd.f32 %v1117, 0.0
        %v1166 = vadd.f32 %v1118, 0.0
        %v1167 = vadd.f32 %v1119, 0.0
        %v1168 = vadd.f32 %v1120, 0.0
        %v1169 = vand.u32 2147483647, %v1105
        %v1170 = vand.u32 2147483647, %v1106
        %v1171 = vand.u32 2147483647, %v1107
        %v1172 = vand.u32 2147483647, %v1108
        %v1173 = vand.u32 2147483647, %v1109
        %v1174 = vand.u32 2147483647, %v1110
        %v1175 = vand.u32 2147483647, %v1111
        %v1176 = vand.u32 2147483647, %v1112
        %v1177 = vand.u32 2147483647, %v1113
        %v1178 = vand.u32 2147483647, %v1114
        %v1179 = vand.u32 2147483647, %v1115
        %v1180 = vand.u32 2147483647, %v1116
        %v1181 = vand.u32 2147483647, %v1117
        %v1182 = vand.u32 2147483647, %v1118
        %v1183 = vand.u32 2147483647, %v1119
        %v1184 = vand.u32 2147483647, %v1120
        %v1185 = vsub.f32 0.0, %v1169
        %v1186 = vsub.f32 0.0, %v1170
        %v1187 = vsub.f32 0.0, %v1171
        %v1188 = vsub.f32 0.0, %v1172
        %v1189 = vsub.f32 0.0, %v1173
        %v1190 = vsub.f32 0.0, %v1174
        %v1191 = vsub.f32 0.0, %v1175
        %v1192 = vsub.f32 0.0, %v1176
        %v1193 = vsub.f32 0.0, %v1177
        %v1194 = vsub.f32 0.0, %v1178
        %v1195 = vsub.f32 0.0, %v1179
        %v1196 = vsub.f32 0.0, %v1180
        %v1197 = vsub.f32 0.0, %v1181
        %v1198 = vsub.f32 0.0, %v1182
        %v1199 = vsub.f32 0.0, %v1183
        %v1200 = vsub.f32 0.0, %v1184
        %v1201 = vmul.f32 %v1185, 1.442695
        %v1202 = vpow.pop %v1201
        %v1203 = vmul.f32 %v1186, 1.442695
        %v1204 = vpow.pop %v1203
        %v1205 = vmul.f32 %v1187, 1.442695
        %v1206 = vpow.pop %v1205
        %v1207 = vmul.f32 %v1188, 1.442695
        %v1208 = vpow.pop %v1207
        %v1209 = vmul.f32 %v1189, 1.442695
        %v1210 = vpow.pop %v1209
        %v1211 = vmul.f32 %v1190, 1.442695
        %v1212 = vpow.pop %v1211
        %v1213 = vmul.f32 %v1191, 1.442695
        %v1214 = vpow.pop %v1213
        %v1215 = vmul.f32 %v1192, 1.442695
        %v1216 = vpow.pop %v1215
        %v1217 = vmul.f32 %v1193, 1.442695
        %v1218 = vpow.pop %v1217
        %v1219 = vmul.f32 %v1194, 1.442695
        %v1220 = vpow.pop %v1219
        %v1221 = vmul.f32 %v1195, 1.442695
        %v1222 = vpow.pop %v1221
        %v1223 = vmul.f32 %v1196, 1.442695
        %v1224 = vpow.pop %v1223
        %v1225 = vmul.f32 %v1197, 1.442695
        %v1226 = vpow.pop %v1225
        %v1227 = vmul.f32 %v1198, 1.442695
        %v1228 = vpow.pop %v1227
        %v1229 = vmul.f32 %v1199, 1.442695
        %v1230 = vpow.pop %v1229
        %v1231 = vmul.f32 %v1200, 1.442695
        %v1232 = vpow.pop %v1231
        %v1233 = vadd.f32 %v1202, 1.0
        %v1234 = vlog2.pop %v1233
        %v1235 = vmul.f32 %v1234, 0.6931472
        %v1236 = vmul.f32 -0.5, %v1202
        %v1237 = vadd.f32 %v1236, 1.0
        %v1238 = vmul.f32 %v1237, %v1202
        %v1239 = vand.u32 2147483647, %v1202
        %vm1240 = vcmp.lt.f32.partialorder %v1239, 0.0004427343
        %v1241 = vsel %vm1240, %v1238, %v1235
        %v1242 = vadd.f32 %v1204, 1.0
        %v1243 = vlog2.pop %v1242
        %v1244 = vmul.f32 %v1243, 0.6931472
        %v1245 = vmul.f32 -0.5, %v1204
        %v1246 = vadd.f32 %v1245, 1.0
        %v1247 = vmul.f32 %v1246, %v1204
        %v1248 = vand.u32 2147483647, %v1204
        %vm1249 = vcmp.lt.f32.partialorder %v1248, 0.0004427343
        %v1250 = vsel %vm1249, %v1247, %v1244
        %v1251 = vadd.f32 %v1206, 1.0
        %v1252 = vlog2.pop %v1251
        %v1253 = vmul.f32 %v1252, 0.6931472
        %v1254 = vmul.f32 -0.5, %v1206
        %v1255 = vadd.f32 %v1254, 1.0
        %v1256 = vmul.f32 %v1255, %v1206
        %v1257 = vand.u32 2147483647, %v1206
        %vm1258 = vcmp.lt.f32.partialorder %v1257, 0.0004427343
        %v1259 = vsel %vm1258, %v1256, %v1253
        %v1260 = vadd.f32 %v1208, 1.0
        %v1261 = vlog2.pop %v1260
        %v1262 = vmul.f32 %v1261, 0.6931472
        %v1263 = vmul.f32 -0.5, %v1208
        %v1264 = vadd.f32 %v1263, 1.0
        %v1265 = vmul.f32 %v1264, %v1208
        %v1266 = vand.u32 2147483647, %v1208
        %vm1267 = vcmp.lt.f32.partialorder %v1266, 0.0004427343
        %v1268 = vsel %vm1267, %v1265, %v1262
        %v1269 = vadd.f32 %v1210, 1.0
        %v1270 = vlog2.pop %v1269
        %v1271 = vmul.f32 %v1270, 0.6931472
        %v1272 = vmul.f32 -0.5, %v1210
        %v1273 = vadd.f32 %v1272, 1.0
        %v1274 = vmul.f32 %v1273, %v1210
        %v1275 = vand.u32 2147483647, %v1210
        %vm1276 = vcmp.lt.f32.partialorder %v1275, 0.0004427343
        %v1277 = vsel %vm1276, %v1274, %v1271
        %v1278 = vadd.f32 %v1212, 1.0
        %v1279 = vlog2.pop %v1278
        %v1280 = vmul.f32 %v1279, 0.6931472
        %v1281 = vmul.f32 -0.5, %v1212
        %v1282 = vadd.f32 %v1281, 1.0
        %v1283 = vmul.f32 %v1282, %v1212
        %v1284 = vand.u32 2147483647, %v1212
        %vm1285 = vcmp.lt.f32.partialorder %v1284, 0.0004427343
        %v1286 = vsel %vm1285, %v1283, %v1280
        %v1287 = vadd.f32 %v1214, 1.0
        %v1288 = vlog2.pop %v1287
        %v1289 = vmul.f32 %v1288, 0.6931472
        %v1290 = vmul.f32 -0.5, %v1214
        %v1291 = vadd.f32 %v1290, 1.0
        %v1292 = vmul.f32 %v1291, %v1214
        %v1293 = vand.u32 2147483647, %v1214
        %vm1294 = vcmp.lt.f32.partialorder %v1293, 0.0004427343
        %v1295 = vsel %vm1294, %v1292, %v1289
        %v1296 = vadd.f32 %v1216, 1.0
        %v1297 = vlog2.pop %v1296
        %v1298 = vmul.f32 %v1297, 0.6931472
        %v1299 = vmul.f32 -0.5, %v1216
        %v1300 = vadd.f32 %v1299, 1.0
        %v1301 = vmul.f32 %v1300, %v1216
        %v1302 = vand.u32 2147483647, %v1216
        %vm1303 = vcmp.lt.f32.partialorder %v1302, 0.0004427343
        %v1304 = vsel %vm1303, %v1301, %v1298
        %v1305 = vadd.f32 %v1218, 1.0
        %v1306 = vlog2.pop %v1305
        %v1307 = vmul.f32 %v1306, 0.6931472
        %v1308 = vmul.f32 -0.5, %v1218
        %v1309 = vadd.f32 %v1308, 1.0
        %v1310 = vmul.f32 %v1309, %v1218
        %v1311 = vand.u32 2147483647, %v1218
        %vm1312 = vcmp.lt.f32.partialorder %v1311, 0.0004427343
        %v1313 = vsel %vm1312, %v1310, %v1307
        %v1314 = vadd.f32 %v1220, 1.0
        %v1315 = vlog2.pop %v1314
        %v1316 = vmul.f32 %v1315, 0.6931472
        %v1317 = vmul.f32 -0.5, %v1220
        %v1318 = vadd.f32 %v1317, 1.0
        %v1319 = vmul.f32 %v1318, %v1220
        %v1320 = vand.u32 2147483647, %v1220
        %vm1321 = vcmp.lt.f32.partialorder %v1320, 0.0004427343
        %v1322 = vsel %vm1321, %v1319, %v1316
        %v1323 = vadd.f32 %v1222, 1.0
        %v1324 = vlog2.pop %v1323
        %v1325 = vmul.f32 %v1324, 0.6931472
        %v1326 = vmul.f32 -0.5, %v1222
        %v1327 = vadd.f32 %v1326, 1.0
        %v1328 = vmul.f32 %v1327, %v1222
        %v1329 = vand.u32 2147483647, %v1222
        %vm1330 = vcmp.lt.f32.partialorder %v1329, 0.0004427343
        %v1331 = vsel %vm1330, %v1328, %v1325
        %v1332 = vadd.f32 %v1224, 1.0
        %v1333 = vlog2.pop %v1332
        %v1334 = vmul.f32 %v1333, 0.6931472
        %v1335 = vmul.f32 -0.5, %v1224
        %v1336 = vadd.f32 %v1335, 1.0
        %v1337 = vmul.f32 %v1336, %v1224
        %v1338 = vand.u32 2147483647, %v1224
        %vm1339 = vcmp.lt.f32.partialorder %v1338, 0.0004427343
        %v1340 = vsel %vm1339, %v1337, %v1334
        %v1341 = vadd.f32 %v1226, 1.0
        %v1342 = vlog2.pop %v1341
        %v1343 = vmul.f32 %v1342, 0.6931472
        %v1344 = vmul.f32 -0.5, %v1226
        %v1345 = vadd.f32 %v1344, 1.0
        %v1346 = vmul.f32 %v1345, %v1226
        %v1347 = vand.u32 2147483647, %v1226
        %vm1348 = vcmp.lt.f32.partialorder %v1347, 0.0004427343
        %v1349 = vsel %vm1348, %v1346, %v1343
        %v1350 = vadd.f32 %v1228, 1.0
        %v1351 = vlog2.pop %v1350
        %v1352 = vmul.f32 %v1351, 0.6931472
        %v1353 = vmul.f32 -0.5, %v1228
        %v1354 = vadd.f32 %v1353, 1.0
        %v1355 = vmul.f32 %v1354, %v1228
        %v1356 = vand.u32 2147483647, %v1228
        %vm1357 = vcmp.lt.f32.partialorder %v1356, 0.0004427343
        %v1358 = vsel %vm1357, %v1355, %v1352
        %v1359 = vadd.f32 %v1230, 1.0
        %v1360 = vlog2.pop %v1359
        %v1361 = vmul.f32 %v1360, 0.6931472
        %v1362 = vmul.f32 -0.5, %v1230
        %v1363 = vadd.f32 %v1362, 1.0
        %v1364 = vmul.f32 %v1363, %v1230
        %v1365 = vand.u32 2147483647, %v1230
        %vm1366 = vcmp.lt.f32.partialorder %v1365, 0.0004427343
        %v1367 = vsel %vm1366, %v1364, %v1361
        %v1368 = vadd.f32 %v1232, 1.0
        %v1369 = vlog2.pop %v1368
        %v1370 = vmul.f32 %v1369, 0.6931472
        %v1371 = vmul.f32 -0.5, %v1232
        %v1372 = vadd.f32 %v1371, 1.0
        %v1373 = vmul.f32 %v1372, %v1232
        %v1374 = vand.u32 2147483647, %v1232
        %vm1375 = vcmp.lt.f32.partialorder %v1374, 0.0004427343
        %v1376 = vsel %vm1375, %v1373, %v1370
        %v1377 = vadd.f32 %v1121, %v1241
        %v1378 = vadd.f32 %v1122, %v1250
        %v1379 = vadd.f32 %v1123, %v1259
        %v1380 = vadd.f32 %v1124, %v1268
        %v1381 = vadd.f32 %v1125, %v1277
        %v1382 = vadd.f32 %v1126, %v1286
        %v1383 = vadd.f32 %v1127, %v1295
        %v1384 = vadd.f32 %v1128, %v1304
        %v1385 = vadd.f32 %v1129, %v1313
        %v1386 = vadd.f32 %v1130, %v1322
        %v1387 = vadd.f32 %v1131, %v1331
        %v1388 = vadd.f32 %v1132, %v1340
        %v1389 = vadd.f32 %v1133, %v1349
        %v1390 = vadd.f32 %v1134, %v1358
        %v1391 = vadd.f32 %v1135, %v1367
        %v1392 = vadd.f32 %v1136, %v1376
        %v1393 = vsel %vm1137, %v1153, %v1377
        %v1394 = vsel %vm1138, %v1154, %v1378
        %v1395 = vsel %vm1139, %v1155, %v1379
        %v1396 = vsel %vm1140, %v1156, %v1380
        %v1397 = vsel %vm1141, %v1157, %v1381
        %v1398 = vsel %vm1142, %v1158, %v1382
        %v1399 = vsel %vm1143, %v1159, %v1383
        %v1400 = vsel %vm1144, %v1160, %v1384
        %v1401 = vsel %vm1145, %v1161, %v1385
        %v1402 = vsel %vm1146, %v1162, %v1386
        %v1403 = vsel %vm1147, %v1163, %v1387
        %v1404 = vsel %vm1148, %v1164, %v1388
        %v1405 = vsel %vm1149, %v1165, %v1389
        %v1406 = vsel %vm1150, %v1166, %v1390
        %v1407 = vsel %vm1151, %v1167, %v1391
        %v1408 = vsel %vm1152, %v1168, %v1392
        %v1409 = vsel %vm529, %v1393, 0.0
        %v1410 = vsel %vm530, %v1394, 0.0
        %v1411 = vsel %vm531, %v1395, 0.0
        %v1412 = vsel %vm532, %v1396, 0.0
        %v1413 = vsel %vm533, %v1397, 0.0
        %v1414 = vsel %vm534, %v1398, 0.0
        %v1415 = vsel %vm535, %v1399, 0.0
        %v1416 = vsel %vm536, %v1400, 0.0
        %v1417 = vsel %vm537, %v1401, 0.0
        %v1418 = vsel %vm538, %v1402, 0.0
        %v1419 = vsel %vm539, %v1403, 0.0
        %v1420 = vsel %vm540, %v1404, 0.0
        %v1421 = vsel %vm541, %v1405, 0.0
        %v1422 = vsel %vm542, %v1406, 0.0
        %v1423 = vsel %vm543, %v1407, 0.0
        %v1424 = vsel %vm544, %v1408, 0.0
        %vm1425 = vcmask 7168
        %v1426 = vsel %vm1425, %v1409, 0.0
        %v1427 = vsel %vm1425, %v1410, 0.0
        %v1428 = vadd.f32 %v1426, %v1427
        %v1429 = vsel %vm1425, %v1411, 0.0
        %v1430 = vadd.f32 %v1428, %v1429
        %v1431 = vsel %vm1425, %v1412, 0.0
        %v1432 = vadd.f32 %v1430, %v1431
        %v1433 = vsel %vm1425, %v1413, 0.0
        %v1434 = vadd.f32 %v1432, %v1433
        %v1435 = vsel %vm1425, %v1414, 0.0
        %v1436 = vadd.f32 %v1434, %v1435
        %v1437 = vsel %vm1425, %v1415, 0.0
        %v1438 = vadd.f32 %v1436, %v1437
        %v1439 = vsel %vm1425, %v1416, 0.0
        %v1440 = vadd.f32 %v1438, %v1439
        %v1441 = vsel %vm1425, %v1417, 0.0
        %v1442 = vadd.f32 %v1440, %v1441
        %v1443 = vsel %vm1425, %v1418, 0.0
        %v1444 = vadd.f32 %v1442, %v1443
        %v1445 = vsel %vm1425, %v1419, 0.0
        %v1446 = vadd.f32 %v1444, %v1445
        %v1447 = vsel %vm1425, %v1420, 0.0
        %v1448 = vadd.f32 %v1446, %v1447
        %v1449 = vsel %vm1425, %v1421, 0.0
        %v1450 = vadd.f32 %v1448, %v1449
        %v1451 = vsel %vm1425, %v1422, 0.0
        %v1452 = vadd.f32 %v1450, %v1451
        %v1453 = vsel %vm1425, %v1423, 0.0
        %v1454 = vadd.f32 %v1452, %v1453
        %v1455 = vsel %vm1425, %v1424, 0.0
        %v1456 = vadd.f32 %v1454, %v1455
        %1457 = vadd.xlane.f32.xlu0 %v1456
        %v1458 = vpop.xlane.xlu0 %1457
        %v1459 = vrot.slane %v1458, 4
        %v1460 = vadd.f32 %v1458, %v1459
        %v1461 = vrot.slane %v1460, 2
        %v1462 = vadd.f32 %v1460, %v1461
        %v1463 = vrot.slane %v1462, 1
        %v1464 = vadd.f32 %v1462, %v1463
        %s1465 = vtos %v1464
        %v1466 = vrcp.pop 8.0
        %v1467 = vmul.f32 8.0, %v1466
        %v1468 = vsub.f32 1.0, %v1467
        %v1469 = vmul.f32 %v1466, %v1468
        %v1470 = vadd.f32 %v1466, %v1469
        %vm1471 = vweird.f32 %v1466
        %v1472 = vsel %vm1471, %v1466, %v1470
        %s1473 = vtos %v1472
        %s1474 = smul.f32 %s1465, %s1473
        %v1475 = vstv %s1474
        %1476 = vst [vmem:[%s151] sm:$0xff] %v1475
        %s1477 = sand.u32 %s76, 1
        %s1478 = scalar_lea.sflag [#allocation3], %s1477
        %s1479 = sand.u32 %s76, 1
        %s1480 = smul.addr %s1479, 8
        %s1481 = scalar_lea.vmem [#allocation2], %s1480
        // Predicated region
        $region29: #{tpu_custom_call.1} parent=27 // pred_check
          %p1482 = pneg %p86
        $region30: #{tpu_custom_call.1} parent=27 // pred_check_branch
          %1484 = sbr.rel (%p1482) target = $region32
        $region31: #{tpu_custom_call.1} parent=27 // pred_region
          %1486 = vsyncadd %s1478, 0
          %s1487 = smul.addr %s16, 8
          %s1488 = scalar_lea.hbm %s2, %s1487
          %s1490 = sshll.u32 %s1481, 4
          %s1491 = int_to_ptr.vmem [resolvable:$true] %s1490
          %s1492 = sshll.u32 %s1488, 4
          %s1493 = int_to_ptr.hbm [resolvable:$true] %s1492
          %1495 = dma.vmem_to_hbm [thread:$0]  %s1491, 128, %s1493, %s1478
        $region32: #{tpu_custom_call.1} parent=27 // pred_fallthru
          _
      $region28: #{tpu_custom_call.1} parent=5 // pred_fallthru
        _
      %p1496 = scmp.le.s32.totalorder 2, %s11
      // Predicated region
      $region33: #{tpu_custom_call.1} parent=5 // pred_check
        %p1497 = pneg %p1496
      $region34: #{tpu_custom_call.1} parent=5 // pred_check_branch
        %1499 = sbr.rel (%p1497) target = $region36
      $region35: #{tpu_custom_call.1} parent=5 // pred_region
        %s1500 = ssub.s32 %s11, 2
        // Predicated region
        $region37: #{tpu_custom_call.1} parent=35 // pred_check
          %p1501 = pneg %p92
        $region38: #{tpu_custom_call.1} parent=35 // pred_check_branch
          %1503 = sbr.rel (%p1501) target = $region40
        $region39: #{tpu_custom_call.1} parent=35 // pred_region
          %s1504 = sand.u32 %s77, 1
          %s1505 = scalar_lea.sflag [#allocation3], %s1504
          %s1506 = sand.u32 %s77, 1
          %s1507 = smul.addr %s1506, 8
          %s1508 = scalar_lea.vmem [#allocation2], %s1507
          %1510 = dma.done %s1505, 128
        $region40: #{tpu_custom_call.1} parent=35 // pred_fallthru
          _
      $region36: #{tpu_custom_call.1} parent=5 // pred_fallthru
        _
    $region6: #{tpu_custom_call.1} parent=1 // loop_footer
      %s15 = sadd.s32 1, %s11
    $region7: #{tpu_custom_call.1} parent=1 // loop_footer_branch
      %10 = sbr.rel target = $region3
    $region8: #{tpu_custom_call.1} parent=1 // loop_exit
      _
    %1511 = vsyncpa [#allocation3], 1
    %s1512 = scalar_lea.sflag [#allocation3], 1
    %1513 = vsyncpa %s1512, 1

</llo_original>
